<compile_context>
chip_gen: v5e
topology: v5e:2x2
jax: 0.10.0
libtpu: 0.0.40
codegen_flags: <defaults>
</compile_context>

<pallas_src>
import functools

import jax
import jax.numpy as jnp
from jax.experimental import pallas as pl
from jax.experimental.pallas import tpu as pltpu

EPS = 1e-5  # LayerNorm epsilon (use_fast_variance=False style: E[(x-mean)^2])

# parameter ordering used by init_params / reference (original unfused layout)
PARAM_ORDER = [
    # --- self-attention branch ---
    "a_sc_ln_g",     # (1, Csc)  single_cond LayerNorm scale (no offset)
    "a_scale_w",     # (Csc, C)  single_cond_scale weight (Linear w/ bias)
    "a_scale_b",     # (1, C)
    "a_bias_w",      # (Csc, C)  single_cond_bias weight (no bias)
    "q_w",           # (C, H*Dk) q_projection (flattened over heads)
    "q_b",           # (1, H*Dk) q_projection_bias
    "k_w",           # (C, H*Dk)
    "v_w",           # (C, H*Dv)
    "gate_w",        # (C, H*Dv) gating_query (Linear, no bias) -- stored as x@W
    "azi_w",         # (H*Dv, C) adaptive_zero_init.transition2 (no bias)
    "azi_cond_w",    # (Csc, C)  adaptive_zero_cond (Linear w/ bias)
    "azi_cond_b",    # (1, C)
    # --- transition branch ---
    "t_sc_ln_g",     # (1, Csc)
    "t_scale_w",     # (Csc, C)
    "t_scale_b",     # (1, C)
    "t_bias_w",      # (Csc, C)
    "ffw1_w",        # (C, 2F)   ffw_transition1 (no bias)
    "t_azi_w",       # (F, C)
    "t_azi_cond_w",  # (Csc, C)
    "t_azi_cond_b",  # (1, C)
]


def _layernorm(x):
  m = jnp.mean(x, axis=-1, keepdims=True)
  v = jnp.mean((x - m) ** 2, axis=-1, keepdims=True)
  return (x - m) * jax.lax.rsqrt(v + EPS)


def _transformer_block_kernel(
    act_ref, mask_ref, pair_ref, sc_ref,
    a_ln_g_ref, a_sb_w_ref, a_sb_b_ref, qkvg_w_ref, q_b_ref,
    azi_w_ref, cond_w_ref, cond_b_ref,
    t_ln_g_ref, t_sb_w_ref, t_sb_b_ref, ffw1_w_ref, t_azi_w_ref,
    out_ref,
    q_s, k_s, v_s, g_s, scn_s, mb_s, acc_s,
    *, num_head, key_dim_ph, value_dim_ph, num_inter, num_channels,
    compute_dtype):
  f32 = jnp.float32
  cdt = compute_dtype
  H, Dk, Dv = num_head, key_dim_ph, value_dim_ph
  C, F = num_channels, num_inter
  HDk, HDv = H * Dk, H * Dv
  h = pl.program_id(1)

  # ---------- prologue: per-batch projections (runs once, at head 0) ----------
  @pl.when(h == 0)
  def _prologue():
    x = act_ref[0].astype(f32)          # (S, C)
    sc = sc_ref[0].astype(f32)          # (S, Csc)
    # mask bias, computed once per batch (reused by every head)
    mb_s[...] = 1e9 * (mask_ref[0].astype(f32) - 1.0)        # (1, S)
    xn = _layernorm(x)
    scn0 = _layernorm(sc)               # shared by attention & transition
    scn_s[...] = scn0
    scn = scn0 * a_ln_g_ref[...]
    # fused single_cond_scale / single_cond_bias (one wide matmul)
    sb = jnp.dot(scn.astype(cdt), a_sb_w_ref[...],
                 preferred_element_type=f32) + a_sb_b_ref[...]
    xa = jax.nn.sigmoid(sb[:, :C]) * xn + sb[:, C:]
    # fused q/k/v/gate projections (one wide MXU matmul).  q weights and bias
    # are pre-scaled by Dk**-0.5 at weight-prep time, so no per-step scale.
    qkvg = jnp.dot(xa.astype(cdt), qkvg_w_ref[...],
                   preferred_element_type=f32)
    q = qkvg[:, :HDk] + q_b_ref[...]
    k = qkvg[:, HDk:2 * HDk]
    v = qkvg[:, 2 * HDk:2 * HDk + HDv]
    g = jax.nn.sigmoid(qkvg[:, 2 * HDk + HDv:])
    # split into per-head slabs once (static slices, unrolled at trace time)
    for hh in range(H):
      q_s[hh] = q[:, hh * Dk:(hh + 1) * Dk].astype(q_s.dtype)
      k_s[hh] = k[:, hh * Dk:(hh + 1) * Dk].astype(k_s.dtype)
      v_s[hh] = v[:, hh * Dv:(hh + 1) * Dv].astype(v_s.dtype)
      g_s[hh] = g[:, hh * Dv:(hh + 1) * Dv]
    acc_s[...] = jnp.zeros_like(acc_s)

  # ---------- per-head attention (pair_logits head-tiled via the grid) -------
  # TODO(synk): torch_attn is not shown in the reference source; standard
  # scaled-dot-product attention with key_dim_per_head**-0.5 scaling assumed.
  qh = q_s[h]                                                # (S, Dk)
  kh = k_s[h]
  vh = v_s[h]
  logits = jax.lax.dot_general(qh, kh, (((1,), (1,)), ((), ())),
                               preferred_element_type=f32)   # (S, S)
  logits = logits + mb_s[...] + pair_ref[0, 0].astype(f32)
  mx = jnp.max(logits, axis=-1, keepdims=True)
  e = jnp.exp(logits - mx)
  denom = jnp.sum(e, axis=-1, keepdims=True)
  p = e * pl.reciprocal(denom, approx=True)                  # EUP, not VPU div
  o = jnp.dot(p.astype(cdt), vh, preferred_element_type=f32)  # (S, Dv)
  o = o * g_s[h]                                             # per-head gate
  # accumulate through this head's (Dv, C) slice of transition2 -- no concat
  acc_s[...] += jnp.dot(o.astype(cdt), azi_w_ref[0],
                        preferred_element_type=f32)

  # ---------- epilogue: residuals + SwiGLU transition (at last head) ---------
  @pl.when(h == pl.num_programs(1) - 1)
  def _epilogue():
    x = act_ref[0].astype(f32)
    sc = sc_ref[0].astype(f32)
    # fused adaptive_zero_cond for both branches (raw single_cond input)
    condb = jnp.dot(sc.astype(cdt), cond_w_ref[...],
                    preferred_element_type=f32) + cond_b_ref[...]
    act1 = x + jax.nn.sigmoid(condb[:, :C]) * acc_s[...]      # residual 1
    xn2 = _layernorm(act1)
    scn2 = scn_s[...] * t_ln_g_ref[...]                       # reuse ln(sc)
    sb2 = jnp.dot(scn2.astype(cdt), t_sb_w_ref[...],
                  preferred_element_type=f32) + t_sb_b_ref[...]
    xt = jax.nn.sigmoid(sb2[:, :C]) * xn2 + sb2[:, C:]
    hidden = jnp.dot(xt.astype(cdt), ffw1_w_ref[...],
                     preferred_element_type=f32)              # (S, 2F)
    cmid = jax.nn.silu(hidden[:, :F]) * hidden[:, F:]         # SwiGLU
    tout = jnp.dot(cmid.astype(cdt), t_azi_w_ref[...],
                   preferred_element_type=f32)
    out_ref[0] = (act1 + jax.nn.sigmoid(condb[:, C:]) * tout
                  ).astype(out_ref.dtype)                     # residual 2


def transformer_block(act, mask, pair_logits, single_cond, params, *,
                      num_head, key_dim_ph, value_dim_ph, num_inter,
                      matmul_dtype=jnp.float32):
  B, S, C = act.shape
  Csc = single_cond.shape[-1]
  H, Dk, Dv, F = num_head, key_dim_ph, value_dim_ph, num_inter
  f32 = jnp.float32
  wdt = matmul_dtype

  mask3 = mask.astype(f32).reshape(B, 1, S)

  # ---- fuse / reshape weights outside the kernel (one-time weight prep) ----
  zc = jnp.zeros((1, C), f32)
  scale = jnp.float32(Dk) ** -0.5
  a_ln_g = params["a_sc_ln_g"].astype(f32)
  t_ln_g = params["t_sc_ln_g"].astype(f32)
  a_sb_w = jnp.concatenate([params["a_scale_w"], params["a_bias_w"]],
                           axis=1).astype(wdt)                 # (Csc, 2C)
  a_sb_b = jnp.concatenate([params["a_scale_b"], zc], axis=1).astype(f32)
  # fold the 1/sqrt(Dk) attention scale into the q weights / bias once
  qkvg_w = jnp.concatenate([params["q_w"] * scale, params["k_w"],
                            params["v_w"], params["gate_w"]],
                           axis=1).astype(wdt)                 # (C, 2HDk+2HDv)
  q_b = (params["q_b"] * scale).astype(f32)
  azi_w = params["azi_w"].reshape(H, Dv, C).astype(wdt)        # head-blocked
  cond_w = jnp.concatenate([params["azi_cond_w"], params["t_azi_cond_w"]],
                           axis=1).astype(wdt)                 # (Csc, 2C)
  cond_b = jnp.concatenate([params["azi_cond_b"], params["t_azi_cond_b"]],
                           axis=1).astype(f32)
  t_sb_w = jnp.concatenate([params["t_scale_w"], params["t_bias_w"]],
                           axis=1).astype(wdt)
  t_sb_b = jnp.concatenate([params["t_scale_b"], zc], axis=1).astype(f32)
  ffw1_w = params["ffw1_w"].astype(wdt)
  t_azi_w = params["t_azi_w"].astype(wdt)

  weights = [a_ln_g, a_sb_w, a_sb_b, qkvg_w, q_b, azi_w, cond_w, cond_b,
             t_ln_g, t_sb_w, t_sb_b, ffw1_w, t_azi_w]

  def const_spec(arr):
    nd = arr.ndim
    return pl.BlockSpec(arr.shape, lambda b, h, nd=nd: (0,) * nd)

  w_specs = [const_spec(w) for w in weights]
  # transition2 weight is streamed one head-slice per grid step
  w_specs[5] = pl.BlockSpec((1, Dv, C), lambda b, h: (h, 0, 0))

  in_specs = [
      pl.BlockSpec((1, S, C), lambda b, h: (b, 0, 0)),         # act (resident)
      pl.BlockSpec((1, 1, S), lambda b, h: (b, 0, 0)),         # mask
      pl.BlockSpec((1, 1, S, S), lambda b, h: (b, h, 0, 0)),   # pair, per head
      pl.BlockSpec((1, S, Csc), lambda b, h: (b, 0, 0)),       # single_cond
  ] + w_specs

  kernel = functools.partial(
      _transformer_block_kernel,
      num_head=H, key_dim_ph=Dk, value_dim_ph=Dv, num_inter=F,
      num_channels=C, compute_dtype=wdt)

  return pl.pallas_call(
      kernel,
      out_shape=jax.ShapeDtypeStruct((B, S, C), act.dtype),
      grid_spec=pltpu.PrefetchScalarGridSpec(
          num_scalar_prefetch=0,
          grid=(B, H),
          in_specs=in_specs,
          out_specs=pl.BlockSpec((1, S, C), lambda b, h: (b, 0, 0)),
          scratch_shapes=[
              pltpu.VMEM((H, S, Dk), wdt),       # q, per head
              pltpu.VMEM((H, S, Dk), wdt),       # k, per head
              pltpu.VMEM((H, S, Dv), wdt),       # v, per head
              pltpu.VMEM((H, S, Dv), f32),       # gate, per head
              pltpu.VMEM((S, Csc), f32),         # ln(single_cond), reused
              pltpu.VMEM((1, S), f32),           # mask bias, per batch
              pltpu.VMEM((S, C), f32),           # attention-output accumulator
          ]),
      compiler_params=pltpu.CompilerParams(
          dimension_semantics=("parallel", "arbitrary"),
          vmem_limit_bytes=64 * 1024 * 1024),
  )(act, mask3, pair_logits, single_cond, *weights)


# ---------------- pure-JAX reference for validation ----------------
def reference_forward(act, mask, pair_logits, single_cond, p, *,
                      num_head, key_dim_ph, value_dim_ph, num_inter):
  def ln(x):
    m = x.mean(-1, keepdims=True)
    v = ((x - m) ** 2).mean(-1, keepdims=True)
    return (x - m) / jnp.sqrt(v + EPS)

  x, sc = act, single_cond
  mask = mask.astype(jnp.float32)
  xn = ln(x)
  scn = ln(sc) * p["a_sc_ln_g"][0]
  xa = (jax.nn.sigmoid(scn @ p["a_scale_w"] + p["a_scale_b"][0]) * xn
        + scn @ p["a_bias_w"])
  mask_bias = 1e9 * (mask - 1.0)                    # (B, S)
  q = xa @ p["q_w"] + p["q_b"][0]
  k = xa @ p["k_w"]
  v = xa @ p["v_w"]
  outs = []
  for h in range(num_head):
    ks = slice(h * key_dim_ph, (h + 1) * key_dim_ph)
    vs = slice(h * value_dim_ph, (h + 1) * value_dim_ph)
    qh = q[..., ks] * key_dim_ph ** -0.5
    kh = k[..., ks]
    vh = v[..., vs]
    logits = jnp.einsum("bqd,bkd->bqk", qh, kh)
    logits = logits + mask_bias[:, None, :] + pair_logits[:, h]
    w = jax.nn.softmax(logits, axis=-1)
    outs.append(jnp.einsum("bqk,bkd->bqd", w, vh))
  weighted = jnp.concatenate(outs, -1)
  weighted = weighted * jax.nn.sigmoid(xa @ p["gate_w"])
  attn_out = weighted @ p["azi_w"]
  attn_out = jax.nn.sigmoid(sc @ p["azi_cond_w"] + p["azi_cond_b"][0]) * attn_out
  act1 = x + attn_out

  xn2 = ln(act1)
  scn2 = ln(sc) * p["t_sc_ln_g"][0]
  xt = (jax.nn.sigmoid(scn2 @ p["t_scale_w"] + p["t_scale_b"][0]) * xn2
        + scn2 @ p["t_bias_w"])
  hmat = xt @ p["ffw1_w"]
  c = jax.nn.silu(hmat[..., :num_inter]) * hmat[..., num_inter:]
  tout = c @ p["t_azi_w"]
  tout = jax.nn.sigmoid(sc @ p["t_azi_cond_w"] + p["t_azi_cond_b"][0]) * tout
  return act1 + tout


def init_params(key, C, Csc, H, Dk, Dv, F):
  shapes = {
      "a_sc_ln_g": (1, Csc), "a_scale_w": (Csc, C), "a_scale_b": (1, C),
      "a_bias_w": (Csc, C),
      "q_w": (C, H * Dk), "q_b": (1, H * Dk),
      "k_w": (C, H * Dk), "v_w": (C, H * Dv),
      "gate_w": (C, H * Dv), "azi_w": (H * Dv, C),
      "azi_cond_w": (Csc, C), "azi_cond_b": (1, C),
      "t_sc_ln_g": (1, Csc), "t_scale_w": (Csc, C), "t_scale_b": (1, C),
      "t_bias_w": (Csc, C), "ffw1_w": (C, 2 * F), "t_azi_w": (F, C),
      "t_azi_cond_w": (Csc, C), "t_azi_cond_b": (1, C),
  }
  params = {}
  keys = jax.random.split(key, len(PARAM_ORDER))
  for k_name, kk in zip(PARAM_ORDER, keys):
    shp = shapes[k_name]
    if k_name.endswith("_ln_g"):
      params[k_name] = jnp.ones(shp, jnp.float32) + 0.1 * jax.random.normal(
          kk, shp, jnp.float32)
    elif k_name.endswith("_b"):
      params[k_name] = 0.1 * jax.random.normal(kk, shp, jnp.float32)
    else:
      fan_in = shp[0]
      params[k_name] = jax.random.normal(kk, shp, jnp.float32) / jnp.sqrt(
          jnp.float32(fan_in))
  return params


if __name__ == "__main__":
  # Small, module-consistent shapes.
  B, S, C, Csc = 2, 16, 64, 32
  H = 4                       # config.attention.num_head
  Dk = C // H                 # key_dim_per_head
  Dv = C // H                 # value_dim_per_head
  FACTOR = 2                  # config.num_intermediate_factor
  F = FACTOR * C              # num_intermediates
  # TODO(synk): global_config.enable_ipex_kernel assumed False (ipex path skipped).

  root = jax.random.PRNGKey(0)
  k_act, k_pair, k_sc, k_par = jax.random.split(root, 4)

  act = jax.random.normal(k_act, (B, S, C), jnp.float32)
  # mask: last 3 positions of batch 1 masked out
  pos = jnp.arange(S)[None, :]
  mask = jnp.where((jnp.arange(B)[:, None] == 1) & (pos >= S - 3), 0.0, 1.0)
  mask = mask.astype(jnp.float32)                      # (B, S)
  pair_logits = 0.5 * jax.random.normal(k_pair, (B, H, S, S), jnp.float32)
  single_cond = jax.random.normal(k_sc, (B, S, Csc), jnp.float32)
  params = init_params(k_par, C, Csc, H, Dk, Dv, F)

  ref = reference_forward(
      act, mask, pair_logits, single_cond, params,
      num_head=H, key_dim_ph=Dk, value_dim_ph=Dv, num_inter=F)
  ref = jax.block_until_ready(ref)

  # f32 MXU operands (reference-accurate; softmax uses approx reciprocal).
  out = transformer_block(
      act, mask, pair_logits, single_cond, params,
      num_head=H, key_dim_ph=Dk, value_dim_ph=Dv, num_inter=F,
      matmul_dtype=jnp.float32)
  out = jax.block_until_ready(out)
  assert out.shape == (B, S, C) and out.dtype == jnp.float32
  assert jnp.allclose(out, ref, atol=1e-2, rtol=1e-2), (
      f"f32 max abs diff = {jnp.max(jnp.abs(out - ref))}")

  # bf16 MXU operands with f32 accumulation (v6e/v7x recommended path).
  out_bf16 = transformer_block(
      act, mask, pair_logits, single_cond, params,
      num_head=H, key_dim_ph=Dk, value_dim_ph=Dv, num_inter=F,
      matmul_dtype=jnp.bfloat16)
  out_bf16 = jax.block_until_ready(out_bf16)
  assert jnp.allclose(out_bf16, ref, atol=1e-1, rtol=1e-1), (
      f"bf16 max abs diff = {jnp.max(jnp.abs(out_bf16 - ref))}")

  print("KERNEL_OK")
</pallas_src>

<mosaic_0001>
module attributes {stable_mosaic.version = 11 : i64} {
  func.func @_transformer_block_kernel(%arg0: i32, %arg1: i32, %arg2: memref<1x16x64xf32, #tpu.memory_space<vmem>>, %arg3: memref<1x1x16xf32, #tpu.memory_space<vmem>>, %arg4: memref<1x1x16x16xf32, #tpu.memory_space<vmem>>, %arg5: memref<1x16x32xf32, #tpu.memory_space<vmem>>, %arg6: memref<1x32xf32, #tpu.memory_space<vmem>>, %arg7: memref<32x128xf32, #tpu.memory_space<vmem>>, %arg8: memref<1x128xf32, #tpu.memory_space<vmem>>, %arg9: memref<64x256xf32, #tpu.memory_space<vmem>>, %arg10: memref<1x64xf32, #tpu.memory_space<vmem>>, %arg11: memref<1x16x64xf32, #tpu.memory_space<vmem>>, %arg12: memref<32x128xf32, #tpu.memory_space<vmem>>, %arg13: memref<1x128xf32, #tpu.memory_space<vmem>>, %arg14: memref<1x32xf32, #tpu.memory_space<vmem>>, %arg15: memref<32x128xf32, #tpu.memory_space<vmem>>, %arg16: memref<1x128xf32, #tpu.memory_space<vmem>>, %arg17: memref<64x256xf32, #tpu.memory_space<vmem>>, %arg18: memref<128x64xf32, #tpu.memory_space<vmem>>, %arg19: memref<1x16x64xf32, #tpu.memory_space<vmem>>, %arg20: memref<4x16x16xf32, #tpu.memory_space<vmem>>, %arg21: memref<4x16x16xf32, #tpu.memory_space<vmem>>, %arg22: memref<4x16x16xf32, #tpu.memory_space<vmem>>, %arg23: memref<4x16x16xf32, #tpu.memory_space<vmem>>, %arg24: memref<16x32xf32, #tpu.memory_space<vmem>>, %arg25: memref<1x16xf32, #tpu.memory_space<vmem>>, %arg26: memref<16x64xf32, #tpu.memory_space<vmem>>) attributes {dimension_semantics = [#tpu.dimension_semantics<parallel>, #tpu.dimension_semantics<arbitrary>], iteration_bounds = array<i64: 2, 4>, scalar_prefetch = 0 : i64, scratch_operands = 7 : i64, tpu.core_type = #tpu.core_type<tc>, window_params = [{transform_indices = @transform_0, window_bounds = array<i64: 1, 16, 64>}, {transform_indices = @transform_1, window_bounds = array<i64: 1, 1, 16>}, {transform_indices = @transform_2, window_bounds = array<i64: 1, 1, 16, 16>}, {transform_indices = @transform_3, window_bounds = array<i64: 1, 16, 32>}, {pipeline_mode = #tpu.pipeline_mode<synchronous>, transform_indices = @transform_4, window_bounds = array<i64: 1, 32>}, {pipeline_mode = #tpu.pipeline_mode<synchronous>, transform_indices = @transform_5, window_bounds = array<i64: 32, 128>}, {pipeline_mode = #tpu.pipeline_mode<synchronous>, transform_indices = @transform_6, window_bounds = array<i64: 1, 128>}, {pipeline_mode = #tpu.pipeline_mode<synchronous>, transform_indices = @transform_7, window_bounds = array<i64: 64, 256>}, {pipeline_mode = #tpu.pipeline_mode<synchronous>, transform_indices = @transform_8, window_bounds = array<i64: 1, 64>}, {transform_indices = @transform_9, window_bounds = array<i64: 1, 16, 64>}, {pipeline_mode = #tpu.pipeline_mode<synchronous>, transform_indices = @transform_10, window_bounds = array<i64: 32, 128>}, {pipeline_mode = #tpu.pipeline_mode<synchronous>, transform_indices = @transform_11, window_bounds = array<i64: 1, 128>}, {pipeline_mode = #tpu.pipeline_mode<synchronous>, transform_indices = @transform_12, window_bounds = array<i64: 1, 32>}, {pipeline_mode = #tpu.pipeline_mode<synchronous>, transform_indices = @transform_13, window_bounds = array<i64: 32, 128>}, {pipeline_mode = #tpu.pipeline_mode<synchronous>, transform_indices = @transform_14, window_bounds = array<i64: 1, 128>}, {pipeline_mode = #tpu.pipeline_mode<synchronous>, transform_indices = @transform_15, window_bounds = array<i64: 64, 256>}, {pipeline_mode = #tpu.pipeline_mode<synchronous>, transform_indices = @transform_16, window_bounds = array<i64: 128, 64>}, {transform_indices = @transform_17, window_bounds = array<i64: 1, 16, 64>}]} {
    %c0_i32 = arith.constant 0 : i32
    %0 = arith.cmpi eq, %arg1, %c0_i32 : i32
    %1 = arith.extui %0 : i1 to i32
    %c0_i32_0 = arith.constant 0 : i32
    %2 = arith.cmpi ne, %1, %c0_i32_0 : i32
    scf.if %2 {
      %c0_26 = arith.constant 0 : index
      %c0_27 = arith.constant 0 : index
      %c0_28 = arith.constant 0 : index
      %43 = vector.load %arg2[%c0_26, %c0_27, %c0_28] : memref<1x16x64xf32, #tpu.memory_space<vmem>>, vector<1x16x64xf32>
      %44 = vector.shape_cast %43 : vector<1x16x64xf32> to vector<16x64xf32>
      %c0_29 = arith.constant 0 : index
      %c0_30 = arith.constant 0 : index
      %c0_31 = arith.constant 0 : index
      %45 = vector.load %arg5[%c0_29, %c0_30, %c0_31] : memref<1x16x32xf32, #tpu.memory_space<vmem>>, vector<1x16x32xf32>
      %46 = vector.shape_cast %45 : vector<1x16x32xf32> to vector<16x32xf32>
      %c0_32 = arith.constant 0 : index
      %c0_33 = arith.constant 0 : index
      %c0_34 = arith.constant 0 : index
      %47 = vector.load %arg3[%c0_32, %c0_33, %c0_34] : memref<1x1x16xf32, #tpu.memory_space<vmem>>, vector<1x1x16xf32>
      %48 = vector.shape_cast %47 : vector<1x1x16xf32> to vector<1x16xf32>
      %cst_35 = arith.constant 1.000000e+00 : f32
      %49 = vector.broadcast %cst_35 : f32 to vector<1x16xf32>
      %50 = arith.subf %48, %49 : vector<1x16xf32>
      %cst_36 = arith.constant 1.000000e+09 : f32
      %51 = vector.broadcast %cst_36 : f32 to vector<1x16xf32>
      %52 = arith.mulf %51, %50 : vector<1x16xf32>
      %c0_37 = arith.constant 0 : index
      %c0_38 = arith.constant 0 : index
      %53 = vector.load %arg25[%c0_37, %c0_38] : memref<1x16xf32, #tpu.memory_space<vmem>>, vector<1x16xf32>
      tpu.vector_store %arg25[%c0_37, %c0_38], %52 {strides = array<i32>} : memref<1x16xf32, #tpu.memory_space<vmem>>, vector<1x16xf32>,
      %cst_39 = arith.constant dense<0.000000e+00> : vector<16xf32>
      %54 = vector.multi_reduction <add>, %44, %cst_39 [1] : vector<16x64xf32> to vector<16xf32>
      %55 = vector.shape_cast %54 : vector<16xf32> to vector<16x1xf32>
      %cst_40 = arith.constant 6.400000e+01 : f32
      %56 = vector.broadcast %cst_40 : f32 to vector<16x1xf32>
      %57 = arith.divf %55, %56 : vector<16x1xf32>
      %58 = vector.broadcast %57 : vector<16x1xf32> to vector<16x64xf32>
      %59 = arith.subf %44, %58 : vector<16x64xf32>
      %60 = arith.mulf %59, %59 : vector<16x64xf32>
      %cst_41 = arith.constant dense<0.000000e+00> : vector<16xf32>
      %61 = vector.multi_reduction <add>, %60, %cst_41 [1] : vector<16x64xf32> to vector<16xf32>
      %62 = vector.shape_cast %61 : vector<16xf32> to vector<16x1xf32>
      %cst_42 = arith.constant 6.400000e+01 : f32
      %63 = vector.broadcast %cst_42 : f32 to vector<16x1xf32>
      %64 = arith.divf %62, %63 : vector<16x1xf32>
      %65 = vector.broadcast %57 : vector<16x1xf32> to vector<16x64xf32>
      %66 = arith.subf %44, %65 : vector<16x64xf32>
      %cst_43 = arith.constant 9.99999974E-6 : f32
      %67 = vector.broadcast %cst_43 : f32 to vector<16x1xf32>
      %68 = arith.addf %64, %67 : vector<16x1xf32>
      %69 = math.rsqrt %68 : vector<16x1xf32>
      %70 = vector.broadcast %69 : vector<16x1xf32> to vector<16x64xf32>
      %71 = arith.mulf %66, %70 : vector<16x64xf32>
      %cst_44 = arith.constant dense<0.000000e+00> : vector<16xf32>
      %72 = vector.multi_reduction <add>, %46, %cst_44 [1] : vector<16x32xf32> to vector<16xf32>
      %73 = vector.shape_cast %72 : vector<16xf32> to vector<16x1xf32>
      %cst_45 = arith.constant 3.200000e+01 : f32
      %74 = vector.broadcast %cst_45 : f32 to vector<16x1xf32>
      %75 = arith.divf %73, %74 : vector<16x1xf32>
      %76 = vector.broadcast %75 : vector<16x1xf32> to vector<16x32xf32>
      %77 = arith.subf %46, %76 : vector<16x32xf32>
      %78 = arith.mulf %77, %77 : vector<16x32xf32>
      %cst_46 = arith.constant dense<0.000000e+00> : vector<16xf32>
      %79 = vector.multi_reduction <add>, %78, %cst_46 [1] : vector<16x32xf32> to vector<16xf32>
      %80 = vector.shape_cast %79 : vector<16xf32> to vector<16x1xf32>
      %cst_47 = arith.constant 3.200000e+01 : f32
      %81 = vector.broadcast %cst_47 : f32 to vector<16x1xf32>
      %82 = arith.divf %80, %81 : vector<16x1xf32>
      %83 = vector.broadcast %75 : vector<16x1xf32> to vector<16x32xf32>
      %84 = arith.subf %46, %83 : vector<16x32xf32>
      %cst_48 = arith.constant 9.99999974E-6 : f32
      %85 = vector.broadcast %cst_48 : f32 to vector<16x1xf32>
      %86 = arith.addf %82, %85 : vector<16x1xf32>
      %87 = math.rsqrt %86 : vector<16x1xf32>
      %88 = vector.broadcast %87 : vector<16x1xf32> to vector<16x32xf32>
      %89 = arith.mulf %84, %88 : vector<16x32xf32>
      %c0_49 = arith.constant 0 : index
      %c0_50 = arith.constant 0 : index
      %90 = vector.load %arg24[%c0_49, %c0_50] : memref<16x32xf32, #tpu.memory_space<vmem>>, vector<16x32xf32>
      tpu.vector_store %arg24[%c0_49, %c0_50], %89 {strides = array<i32>} : memref<16x32xf32, #tpu.memory_space<vmem>>, vector<16x32xf32>,
      %c0_51 = arith.constant 0 : index
      %c0_52 = arith.constant 0 : index
      %91 = vector.load %arg6[%c0_51, %c0_52] : memref<1x32xf32, #tpu.memory_space<vmem>>, vector<1x32xf32>
      %92 = vector.broadcast %91 : vector<1x32xf32> to vector<16x32xf32>
      %93 = arith.mulf %89, %92 : vector<16x32xf32>
      %c0_53 = arith.constant 0 : index
      %c0_54 = arith.constant 0 : index
      %94 = vector.load %arg7[%c0_53, %c0_54] : memref<32x128xf32, #tpu.memory_space<vmem>>, vector<32x128xf32>
      %cst_55 = arith.constant dense<0.000000e+00> : vector<16x128xf32>
      %95 = tpu.matmul %93, %94, %cst_55 {dimension_numbers = #tpu.dot_dimension_numbers<[1], [0], [0], [1], [0, 0, 1, 1], [], []>} : vector<16x32xf32>, vector<32x128xf32>, vector<16x128xf32> -> vector<16x128xf32>
      %c0_56 = arith.constant 0 : index
      %c0_57 = arith.constant 0 : index
      %96 = vector.load %arg8[%c0_56, %c0_57] : memref<1x128xf32, #tpu.memory_space<vmem>>, vector<1x128xf32>
      %97 = vector.broadcast %96 : vector<1x128xf32> to vector<16x128xf32>
      %98 = arith.addf %95, %97 : vector<16x128xf32>
      %99 = vector.extract_strided_slice %98 {offsets = [0, 0], sizes = [16, 64], strides = [1, 1]} : vector<16x128xf32> to vector<16x64xf32>
      %100 = arith.negf %99 : vector<16x64xf32>
      %101 = math.exp %100 : vector<16x64xf32>
      %cst_58 = arith.constant 1.000000e+00 : f32
      %102 = vector.broadcast %cst_58 : f32 to vector<16x64xf32>
      %103 = arith.addf %102, %101 : vector<16x64xf32>
      %104 = arith.divf %102, %103 : vector<16x64xf32>
      %105 = arith.mulf %104, %71 : vector<16x64xf32>
      %106 = vector.extract_strided_slice %98 {offsets = [0, 64], sizes = [16, 64], strides = [1, 1]} : vector<16x128xf32> to vector<16x64xf32>
      %107 = arith.addf %105, %106 : vector<16x64xf32>
      %c0_59 = arith.constant 0 : index
      %c0_60 = arith.constant 0 : index
      %108 = vector.load %arg9[%c0_59, %c0_60] : memref<64x256xf32, #tpu.memory_space<vmem>>, vector<64x256xf32>
      %cst_61 = arith.constant dense<0.000000e+00> : vector<16x256xf32>
      %109 = tpu.matmul %107, %108, %cst_61 {dimension_numbers = #tpu.dot_dimension_numbers<[1], [0], [0], [1], [0, 0, 1, 1], [], []>} : vector<16x64xf32>, vector<64x256xf32>, vector<16x256xf32> -> vector<16x256xf32>
      %110 = vector.extract_strided_slice %109 {offsets = [0, 0], sizes = [16, 64], strides = [1, 1]} : vector<16x256xf32> to vector<16x64xf32>
      %c0_62 = arith.constant 0 : index
      %c0_63 = arith.constant 0 : index
      %111 = vector.load %arg10[%c0_62, %c0_63] : memref<1x64xf32, #tpu.memory_space<vmem>>, vector<1x64xf32>
      %112 = vector.broadcast %111 : vector<1x64xf32> to vector<16x64xf32>
      %113 = arith.addf %110, %112 : vector<16x64xf32>
      %114 = vector.extract_strided_slice %109 {offsets = [0, 64], sizes = [16, 64], strides = [1, 1]} : vector<16x256xf32> to vector<16x64xf32>
      %115 = vector.extract_strided_slice %109 {offsets = [0, 128], sizes = [16, 64], strides = [1, 1]} : vector<16x256xf32> to vector<16x64xf32>
      %116 = vector.extract_strided_slice %109 {offsets = [0, 192], sizes = [16, 64], strides = [1, 1]} : vector<16x256xf32> to vector<16x64xf32>
      %117 = arith.negf %116 : vector<16x64xf32>
      %118 = math.exp %117 : vector<16x64xf32>
      %cst_64 = arith.constant 1.000000e+00 : f32
      %119 = vector.broadcast %cst_64 : f32 to vector<16x64xf32>
      %120 = arith.addf %119, %118 : vector<16x64xf32>
      %121 = arith.divf %119, %120 : vector<16x64xf32>
      %122 = vector.extract_strided_slice %113 {offsets = [0, 0], sizes = [16, 16], strides = [1, 1]} : vector<16x64xf32> to vector<16x16xf32>
      %c0_65 = arith.constant 0 : index
      %c0_66 = arith.constant 0 : index
      %c0_67 = arith.constant 0 : index
      %123 = vector.load %arg20[%c0_65, %c0_66, %c0_67] : memref<4x16x16xf32, #tpu.memory_space<vmem>>, vector<1x16x16xf32>
      %124 = vector.shape_cast %123 : vector<1x16x16xf32> to vector<16x16xf32>
      %125 = vector.shape_cast %122 : vector<16x16xf32> to vector<1x16x16xf32>
      tpu.vector_store %arg20[%c0_65, %c0_66, %c0_67], %125 {strides = array<i32>} : memref<4x16x16xf32, #tpu.memory_space<vmem>>, vector<1x16x16xf32>,
      %126 = vector.extract_strided_slice %114 {offsets = [0, 0], sizes = [16, 16], strides = [1, 1]} : vector<16x64xf32> to vector<16x16xf32>
      %c0_68 = arith.constant 0 : index
      %c0_69 = arith.constant 0 : index
      %c0_70 = arith.constant 0 : index
      %127 = vector.load %arg21[%c0_68, %c0_69, %c0_70] : memref<4x16x16xf32, #tpu.memory_space<vmem>>, vector<1x16x16xf32>
      %128 = vector.shape_cast %127 : vector<1x16x16xf32> to vector<16x16xf32>
      %129 = vector.shape_cast %126 : vector<16x16xf32> to vector<1x16x16xf32>
      tpu.vector_store %arg21[%c0_68, %c0_69, %c0_70], %129 {strides = array<i32>} : memref<4x16x16xf32, #tpu.memory_space<vmem>>, vector<1x16x16xf32>,
      %130 = vector.extract_strided_slice %115 {offsets = [0, 0], sizes = [16, 16], strides = [1, 1]} : vector<16x64xf32> to vector<16x16xf32>
      %c0_71 = arith.constant 0 : index
      %c0_72 = arith.constant 0 : index
      %c0_73 = arith.constant 0 : index
      %131 = vector.load %arg22[%c0_71, %c0_72, %c0_73] : memref<4x16x16xf32, #tpu.memory_space<vmem>>, vector<1x16x16xf32>
      %132 = vector.shape_cast %131 : vector<1x16x16xf32> to vector<16x16xf32>
      %133 = vector.shape_cast %130 : vector<16x16xf32> to vector<1x16x16xf32>
      tpu.vector_store %arg22[%c0_71, %c0_72, %c0_73], %133 {strides = array<i32>} : memref<4x16x16xf32, #tpu.memory_space<vmem>>, vector<1x16x16xf32>,
      %134 = vector.extract_strided_slice %121 {offsets = [0, 0], sizes = [16, 16], strides = [1, 1]} : vector<16x64xf32> to vector<16x16xf32>
      %c0_74 = arith.constant 0 : index
      %c0_75 = arith.constant 0 : index
      %c0_76 = arith.constant 0 : index
      %135 = vector.load %arg23[%c0_74, %c0_75, %c0_76] : memref<4x16x16xf32, #tpu.memory_space<vmem>>, vector<1x16x16xf32>
      %136 = vector.shape_cast %135 : vector<1x16x16xf32> to vector<16x16xf32>
      %137 = vector.shape_cast %134 : vector<16x16xf32> to vector<1x16x16xf32>
      tpu.vector_store %arg23[%c0_74, %c0_75, %c0_76], %137 {strides = array<i32>} : memref<4x16x16xf32, #tpu.memory_space<vmem>>, vector<1x16x16xf32>,
      %138 = vector.extract_strided_slice %113 {offsets = [0, 16], sizes = [16, 16], strides = [1, 1]} : vector<16x64xf32> to vector<16x16xf32>
      %c1 = arith.constant 1 : index
      %c0_77 = arith.constant 0 : index
      %c0_78 = arith.constant 0 : index
      %139 = vector.load %arg20[%c1, %c0_77, %c0_78] : memref<4x16x16xf32, #tpu.memory_space<vmem>>, vector<1x16x16xf32>
      %140 = vector.shape_cast %139 : vector<1x16x16xf32> to vector<16x16xf32>
      %141 = vector.shape_cast %138 : vector<16x16xf32> to vector<1x16x16xf32>
      tpu.vector_store %arg20[%c1, %c0_77, %c0_78], %141 {strides = array<i32>} : memref<4x16x16xf32, #tpu.memory_space<vmem>>, vector<1x16x16xf32>,
      %142 = vector.extract_strided_slice %114 {offsets = [0, 16], sizes = [16, 16], strides = [1, 1]} : vector<16x64xf32> to vector<16x16xf32>
      %c1_79 = arith.constant 1 : index
      %c0_80 = arith.constant 0 : index
      %c0_81 = arith.constant 0 : index
      %143 = vector.load %arg21[%c1_79, %c0_80, %c0_81] : memref<4x16x16xf32, #tpu.memory_space<vmem>>, vector<1x16x16xf32>
      %144 = vector.shape_cast %143 : vector<1x16x16xf32> to vector<16x16xf32>
      %145 = vector.shape_cast %142 : vector<16x16xf32> to vector<1x16x16xf32>
      tpu.vector_store %arg21[%c1_79, %c0_80, %c0_81], %145 {strides = array<i32>} : memref<4x16x16xf32, #tpu.memory_space<vmem>>, vector<1x16x16xf32>,
      %146 = vector.extract_strided_slice %115 {offsets = [0, 16], sizes = [16, 16], strides = [1, 1]} : vector<16x64xf32> to vector<16x16xf32>
      %c1_82 = arith.constant 1 : index
      %c0_83 = arith.constant 0 : index
      %c0_84 = arith.constant 0 : index
      %147 = vector.load %arg22[%c1_82, %c0_83, %c0_84] : memref<4x16x16xf32, #tpu.memory_space<vmem>>, vector<1x16x16xf32>
      %148 = vector.shape_cast %147 : vector<1x16x16xf32> to vector<16x16xf32>
      %149 = vector.shape_cast %146 : vector<16x16xf32> to vector<1x16x16xf32>
      tpu.vector_store %arg22[%c1_82, %c0_83, %c0_84], %149 {strides = array<i32>} : memref<4x16x16xf32, #tpu.memory_space<vmem>>, vector<1x16x16xf32>,
      %150 = vector.extract_strided_slice %121 {offsets = [0, 16], sizes = [16, 16], strides = [1, 1]} : vector<16x64xf32> to vector<16x16xf32>
      %c1_85 = arith.constant 1 : index
      %c0_86 = arith.constant 0 : index
      %c0_87 = arith.constant 0 : index
      %151 = vector.load %arg23[%c1_85, %c0_86, %c0_87] : memref<4x16x16xf32, #tpu.memory_space<vmem>>, vector<1x16x16xf32>
      %152 = vector.shape_cast %151 : vector<1x16x16xf32> to vector<16x16xf32>
      %153 = vector.shape_cast %150 : vector<16x16xf32> to vector<1x16x16xf32>
      tpu.vector_store %arg23[%c1_85, %c0_86, %c0_87], %153 {strides = array<i32>} : memref<4x16x16xf32, #tpu.memory_space<vmem>>, vector<1x16x16xf32>,
      %154 = vector.extract_strided_slice %113 {offsets = [0, 32], sizes = [16, 16], strides = [1, 1]} : vector<16x64xf32> to vector<16x16xf32>
      %c2 = arith.constant 2 : index
      %c0_88 = arith.constant 0 : index
      %c0_89 = arith.constant 0 : index
      %155 = vector.load %arg20[%c2, %c0_88, %c0_89] : memref<4x16x16xf32, #tpu.memory_space<vmem>>, vector<1x16x16xf32>
      %156 = vector.shape_cast %155 : vector<1x16x16xf32> to vector<16x16xf32>
      %157 = vector.shape_cast %154 : vector<16x16xf32> to vector<1x16x16xf32>
      tpu.vector_store %arg20[%c2, %c0_88, %c0_89], %157 {strides = array<i32>} : memref<4x16x16xf32, #tpu.memory_space<vmem>>, vector<1x16x16xf32>,
      %158 = vector.extract_strided_slice %114 {offsets = [0, 32], sizes = [16, 16], strides = [1, 1]} : vector<16x64xf32> to vector<16x16xf32>
      %c2_90 = arith.constant 2 : index
      %c0_91 = arith.constant 0 : index
      %c0_92 = arith.constant 0 : index
      %159 = vector.load %arg21[%c2_90, %c0_91, %c0_92] : memref<4x16x16xf32, #tpu.memory_space<vmem>>, vector<1x16x16xf32>
      %160 = vector.shape_cast %159 : vector<1x16x16xf32> to vector<16x16xf32>
      %161 = vector.shape_cast %158 : vector<16x16xf32> to vector<1x16x16xf32>
      tpu.vector_store %arg21[%c2_90, %c0_91, %c0_92], %161 {strides = array<i32>} : memref<4x16x16xf32, #tpu.memory_space<vmem>>, vector<1x16x16xf32>,
      %162 = vector.extract_strided_slice %115 {offsets = [0, 32], sizes = [16, 16], strides = [1, 1]} : vector<16x64xf32> to vector<16x16xf32>
      %c2_93 = arith.constant 2 : index
      %c0_94 = arith.constant 0 : index
      %c0_95 = arith.constant 0 : index
      %163 = vector.load %arg22[%c2_93, %c0_94, %c0_95] : memref<4x16x16xf32, #tpu.memory_space<vmem>>, vector<1x16x16xf32>
      %164 = vector.shape_cast %163 : vector<1x16x16xf32> to vector<16x16xf32>
      %165 = vector.shape_cast %162 : vector<16x16xf32> to vector<1x16x16xf32>
      tpu.vector_store %arg22[%c2_93, %c0_94, %c0_95], %165 {strides = array<i32>} : memref<4x16x16xf32, #tpu.memory_space<vmem>>, vector<1x16x16xf32>,
      %166 = vector.extract_strided_slice %121 {offsets = [0, 32], sizes = [16, 16], strides = [1, 1]} : vector<16x64xf32> to vector<16x16xf32>
      %c2_96 = arith.constant 2 : index
      %c0_97 = arith.constant 0 : index
      %c0_98 = arith.constant 0 : index
      %167 = vector.load %arg23[%c2_96, %c0_97, %c0_98] : memref<4x16x16xf32, #tpu.memory_space<vmem>>, vector<1x16x16xf32>
      %168 = vector.shape_cast %167 : vector<1x16x16xf32> to vector<16x16xf32>
      %169 = vector.shape_cast %166 : vector<16x16xf32> to vector<1x16x16xf32>
      tpu.vector_store %arg23[%c2_96, %c0_97, %c0_98], %169 {strides = array<i32>} : memref<4x16x16xf32, #tpu.memory_space<vmem>>, vector<1x16x16xf32>,
      %170 = vector.extract_strided_slice %113 {offsets = [0, 48], sizes = [16, 16], strides = [1, 1]} : vector<16x64xf32> to vector<16x16xf32>
      %c3 = arith.constant 3 : index
      %c0_99 = arith.constant 0 : index
      %c0_100 = arith.constant 0 : index
      %171 = vector.load %arg20[%c3, %c0_99, %c0_100] : memref<4x16x16xf32, #tpu.memory_space<vmem>>, vector<1x16x16xf32>
      %172 = vector.shape_cast %171 : vector<1x16x16xf32> to vector<16x16xf32>
      %173 = vector.shape_cast %170 : vector<16x16xf32> to vector<1x16x16xf32>
      tpu.vector_store %arg20[%c3, %c0_99, %c0_100], %173 {strides = array<i32>} : memref<4x16x16xf32, #tpu.memory_space<vmem>>, vector<1x16x16xf32>,
      %174 = vector.extract_strided_slice %114 {offsets = [0, 48], sizes = [16, 16], strides = [1, 1]} : vector<16x64xf32> to vector<16x16xf32>
      %c3_101 = arith.constant 3 : index
      %c0_102 = arith.constant 0 : index
      %c0_103 = arith.constant 0 : index
      %175 = vector.load %arg21[%c3_101, %c0_102, %c0_103] : memref<4x16x16xf32, #tpu.memory_space<vmem>>, vector<1x16x16xf32>
      %176 = vector.shape_cast %175 : vector<1x16x16xf32> to vector<16x16xf32>
      %177 = vector.shape_cast %174 : vector<16x16xf32> to vector<1x16x16xf32>
      tpu.vector_store %arg21[%c3_101, %c0_102, %c0_103], %177 {strides = array<i32>} : memref<4x16x16xf32, #tpu.memory_space<vmem>>, vector<1x16x16xf32>,
      %178 = vector.extract_strided_slice %115 {offsets = [0, 48], sizes = [16, 16], strides = [1, 1]} : vector<16x64xf32> to vector<16x16xf32>
      %c3_104 = arith.constant 3 : index
      %c0_105 = arith.constant 0 : index
      %c0_106 = arith.constant 0 : index
      %179 = vector.load %arg22[%c3_104, %c0_105, %c0_106] : memref<4x16x16xf32, #tpu.memory_space<vmem>>, vector<1x16x16xf32>
      %180 = vector.shape_cast %179 : vector<1x16x16xf32> to vector<16x16xf32>
      %181 = vector.shape_cast %178 : vector<16x16xf32> to vector<1x16x16xf32>
      tpu.vector_store %arg22[%c3_104, %c0_105, %c0_106], %181 {strides = array<i32>} : memref<4x16x16xf32, #tpu.memory_space<vmem>>, vector<1x16x16xf32>,
      %182 = vector.extract_strided_slice %121 {offsets = [0, 48], sizes = [16, 16], strides = [1, 1]} : vector<16x64xf32> to vector<16x16xf32>
      %c3_107 = arith.constant 3 : index
      %c0_108 = arith.constant 0 : index
      %c0_109 = arith.constant 0 : index
      %183 = vector.load %arg23[%c3_107, %c0_108, %c0_109] : memref<4x16x16xf32, #tpu.memory_space<vmem>>, vector<1x16x16xf32>
      %184 = vector.shape_cast %183 : vector<1x16x16xf32> to vector<16x16xf32>
      %185 = vector.shape_cast %182 : vector<16x16xf32> to vector<1x16x16xf32>
      tpu.vector_store %arg23[%c3_107, %c0_108, %c0_109], %185 {strides = array<i32>} : memref<4x16x16xf32, #tpu.memory_space<vmem>>, vector<1x16x16xf32>,
      %cst_110 = arith.constant 0.000000e+00 : f32
      %186 = vector.broadcast %cst_110 : f32 to vector<16x64xf32>
      %c0_111 = arith.constant 0 : index
      %c0_112 = arith.constant 0 : index
      %187 = vector.load %arg26[%c0_111, %c0_112] : memref<16x64xf32, #tpu.memory_space<vmem>>, vector<16x64xf32>
      tpu.vector_store %arg26[%c0_111, %c0_112], %186 {strides = array<i32>} : memref<16x64xf32, #tpu.memory_space<vmem>>, vector<16x64xf32>,
    } else {
    }
    %3 = arith.index_cast %arg1 : i32 to index
    %c0 = arith.constant 0 : index
    %c0_1 = arith.constant 0 : index
    %4 = vector.load %arg20[%3, %c0, %c0_1] : memref<4x16x16xf32, #tpu.memory_space<vmem>>, vector<1x16x16xf32>
    %5 = vector.shape_cast %4 : vector<1x16x16xf32> to vector<16x16xf32>
    %6 = arith.index_cast %arg1 : i32 to index
    %c0_2 = arith.constant 0 : index
    %c0_3 = arith.constant 0 : index
    %7 = vector.load %arg21[%6, %c0_2, %c0_3] : memref<4x16x16xf32, #tpu.memory_space<vmem>>, vector<1x16x16xf32>
    %8 = vector.shape_cast %7 : vector<1x16x16xf32> to vector<16x16xf32>
    %9 = arith.index_cast %arg1 : i32 to index
    %c0_4 = arith.constant 0 : index
    %c0_5 = arith.constant 0 : index
    %10 = vector.load %arg22[%9, %c0_4, %c0_5] : memref<4x16x16xf32, #tpu.memory_space<vmem>>, vector<1x16x16xf32>
    %11 = vector.shape_cast %10 : vector<1x16x16xf32> to vector<16x16xf32>
    %cst = arith.constant dense<0.000000e+00> : vector<16x16xf32>
    %12 = tpu.matmul %5, %8, %cst {dimension_numbers = #tpu.dot_dimension_numbers<[1], [1], [0], [0], [0, 0, 1, 0], [], []>} : vector<16x16xf32>, vector<16x16xf32>, vector<16x16xf32> -> vector<16x16xf32>
    %c0_6 = arith.constant 0 : index
    %c0_7 = arith.constant 0 : index
    %13 = vector.load %arg25[%c0_6, %c0_7] : memref<1x16xf32, #tpu.memory_space<vmem>>, vector<1x16xf32>
    %14 = vector.broadcast %13 : vector<1x16xf32> to vector<16x16xf32>
    %15 = arith.addf %12, %14 : vector<16x16xf32>
    %c0_8 = arith.constant 0 : index
    %c0_9 = arith.constant 0 : index
    %c0_10 = arith.constant 0 : index
    %c0_11 = arith.constant 0 : index
    %16 = vector.load %arg4[%c0_8, %c0_9, %c0_10, %c0_11] : memref<1x1x16x16xf32, #tpu.memory_space<vmem>>, vector<1x1x16x16xf32>
    %17 = vector.shape_cast %16 : vector<1x1x16x16xf32> to vector<16x16xf32>
    %18 = arith.addf %15, %17 : vector<16x16xf32>
    %cst_12 = arith.constant dense<0xFF800000> : vector<16xf32>
    %19 = vector.multi_reduction <maximumf>, %18, %cst_12 [1] : vector<16x16xf32> to vector<16xf32>
    %20 = vector.shape_cast %19 : vector<16xf32> to vector<16x1xf32>
    %21 = vector.broadcast %20 : vector<16x1xf32> to vector<16x16xf32>
    %22 = arith.subf %18, %21 : vector<16x16xf32>
    %23 = math.exp %22 : vector<16x16xf32>
    %cst_13 = arith.constant dense<0.000000e+00> : vector<16xf32>
    %24 = vector.multi_reduction <add>, %23, %cst_13 [1] : vector<16x16xf32> to vector<16xf32>
    %25 = vector.shape_cast %24 : vector<16xf32> to vector<16x1xf32>
    %26 = tpu.reciprocal %25 {approx = true} : vector<16x1xf32> -> vector<16x1xf32>
    %27 = vector.broadcast %26 : vector<16x1xf32> to vector<16x16xf32>
    %28 = arith.mulf %23, %27 : vector<16x16xf32>
    %cst_14 = arith.constant dense<0.000000e+00> : vector<16x16xf32>
    %29 = tpu.matmul %28, %11, %cst_14 {dimension_numbers = #tpu.dot_dimension_numbers<[1], [0], [0], [1], [0, 0, 1, 1], [], []>} : vector<16x16xf32>, vector<16x16xf32>, vector<16x16xf32> -> vector<16x16xf32>
    %30 = arith.index_cast %arg1 : i32 to index
    %c0_15 = arith.constant 0 : index
    %c0_16 = arith.constant 0 : index
    %31 = vector.load %arg23[%30, %c0_15, %c0_16] : memref<4x16x16xf32, #tpu.memory_space<vmem>>, vector<1x16x16xf32>
    %32 = vector.shape_cast %31 : vector<1x16x16xf32> to vector<16x16xf32>
    %33 = arith.mulf %29, %32 : vector<16x16xf32>
    %c0_17 = arith.constant 0 : index
    %c0_18 = arith.constant 0 : index
    %34 = vector.load %arg26[%c0_17, %c0_18] : memref<16x64xf32, #tpu.memory_space<vmem>>, vector<16x64xf32>
    %c0_19 = arith.constant 0 : index
    %c0_20 = arith.constant 0 : index
    %c0_21 = arith.constant 0 : index
    %35 = vector.load %arg11[%c0_19, %c0_20, %c0_21] : memref<1x16x64xf32, #tpu.memory_space<vmem>>, vector<1x16x64xf32>
    %36 = vector.shape_cast %35 : vector<1x16x64xf32> to vector<16x64xf32>
    %cst_22 = arith.constant dense<0.000000e+00> : vector<16x64xf32>
    %37 = tpu.matmul %33, %36, %cst_22 {dimension_numbers = #tpu.dot_dimension_numbers<[1], [0], [0], [1], [0, 0, 1, 1], [], []>} : vector<16x16xf32>, vector<16x64xf32>, vector<16x64xf32> -> vector<16x64xf32>
    %38 = arith.addf %34, %37 : vector<16x64xf32>
    %c0_23 = arith.constant 0 : index
    %c0_24 = arith.constant 0 : index
    %39 = vector.load %arg26[%c0_23, %c0_24] : memref<16x64xf32, #tpu.memory_space<vmem>>, vector<16x64xf32>
    tpu.vector_store %arg26[%c0_23, %c0_24], %38 {strides = array<i32>} : memref<16x64xf32, #tpu.memory_space<vmem>>, vector<16x64xf32>,
    %c3_i32 = arith.constant 3 : i32
    %40 = arith.cmpi eq, %arg1, %c3_i32 : i32
    %41 = arith.extui %40 : i1 to i32
    %c0_i32_25 = arith.constant 0 : i32
    %42 = arith.cmpi ne, %41, %c0_i32_25 : i32
    scf.if %42 {
      %c0_26 = arith.constant 0 : index
      %c0_27 = arith.constant 0 : index
      %c0_28 = arith.constant 0 : index
      %43 = vector.load %arg2[%c0_26, %c0_27, %c0_28] : memref<1x16x64xf32, #tpu.memory_space<vmem>>, vector<1x16x64xf32>
      %44 = vector.shape_cast %43 : vector<1x16x64xf32> to vector<16x64xf32>
      %c0_29 = arith.constant 0 : index
      %c0_30 = arith.constant 0 : index
      %c0_31 = arith.constant 0 : index
      %45 = vector.load %arg5[%c0_29, %c0_30, %c0_31] : memref<1x16x32xf32, #tpu.memory_space<vmem>>, vector<1x16x32xf32>
      %46 = vector.shape_cast %45 : vector<1x16x32xf32> to vector<16x32xf32>
      %c0_32 = arith.constant 0 : index
      %c0_33 = arith.constant 0 : index
      %47 = vector.load %arg12[%c0_32, %c0_33] : memref<32x128xf32, #tpu.memory_space<vmem>>, vector<32x128xf32>
      %cst_34 = arith.constant dense<0.000000e+00> : vector<16x128xf32>
      %48 = tpu.matmul %46, %47, %cst_34 {dimension_numbers = #tpu.dot_dimension_numbers<[1], [0], [0], [1], [0, 0, 1, 1], [], []>} : vector<16x32xf32>, vector<32x128xf32>, vector<16x128xf32> -> vector<16x128xf32>
      %c0_35 = arith.constant 0 : index
      %c0_36 = arith.constant 0 : index
      %49 = vector.load %arg13[%c0_35, %c0_36] : memref<1x128xf32, #tpu.memory_space<vmem>>, vector<1x128xf32>
      %50 = vector.broadcast %49 : vector<1x128xf32> to vector<16x128xf32>
      %51 = arith.addf %48, %50 : vector<16x128xf32>
      %52 = vector.extract_strided_slice %51 {offsets = [0, 0], sizes = [16, 64], strides = [1, 1]} : vector<16x128xf32> to vector<16x64xf32>
      %53 = arith.negf %52 : vector<16x64xf32>
      %54 = math.exp %53 : vector<16x64xf32>
      %cst_37 = arith.constant 1.000000e+00 : f32
      %55 = vector.broadcast %cst_37 : f32 to vector<16x64xf32>
      %56 = arith.addf %55, %54 : vector<16x64xf32>
      %57 = arith.divf %55, %56 : vector<16x64xf32>
      %c0_38 = arith.constant 0 : index
      %c0_39 = arith.constant 0 : index
      %58 = vector.load %arg26[%c0_38, %c0_39] : memref<16x64xf32, #tpu.memory_space<vmem>>, vector<16x64xf32>
      %59 = arith.mulf %57, %58 : vector<16x64xf32>
      %60 = arith.addf %44, %59 : vector<16x64xf32>
      %cst_40 = arith.constant dense<0.000000e+00> : vector<16xf32>
      %61 = vector.multi_reduction <add>, %60, %cst_40 [1] : vector<16x64xf32> to vector<16xf32>
      %62 = vector.shape_cast %61 : vector<16xf32> to vector<16x1xf32>
      %cst_41 = arith.constant 6.400000e+01 : f32
      %63 = vector.broadcast %cst_41 : f32 to vector<16x1xf32>
      %64 = arith.divf %62, %63 : vector<16x1xf32>
      %65 = vector.broadcast %64 : vector<16x1xf32> to vector<16x64xf32>
      %66 = arith.subf %60, %65 : vector<16x64xf32>
      %67 = arith.mulf %66, %66 : vector<16x64xf32>
      %cst_42 = arith.constant dense<0.000000e+00> : vector<16xf32>
      %68 = vector.multi_reduction <add>, %67, %cst_42 [1] : vector<16x64xf32> to vector<16xf32>
      %69 = vector.shape_cast %68 : vector<16xf32> to vector<16x1xf32>
      %cst_43 = arith.constant 6.400000e+01 : f32
      %70 = vector.broadcast %cst_43 : f32 to vector<16x1xf32>
      %71 = arith.divf %69, %70 : vector<16x1xf32>
      %72 = vector.broadcast %64 : vector<16x1xf32> to vector<16x64xf32>
      %73 = arith.subf %60, %72 : vector<16x64xf32>
      %cst_44 = arith.constant 9.99999974E-6 : f32
      %74 = vector.broadcast %cst_44 : f32 to vector<16x1xf32>
      %75 = arith.addf %71, %74 : vector<16x1xf32>
      %76 = math.rsqrt %75 : vector<16x1xf32>
      %77 = vector.broadcast %76 : vector<16x1xf32> to vector<16x64xf32>
      %78 = arith.mulf %73, %77 : vector<16x64xf32>
      %c0_45 = arith.constant 0 : index
      %c0_46 = arith.constant 0 : index
      %79 = vector.load %arg24[%c0_45, %c0_46] : memref<16x32xf32, #tpu.memory_space<vmem>>, vector<16x32xf32>
      %c0_47 = arith.constant 0 : index
      %c0_48 = arith.constant 0 : index
      %80 = vector.load %arg14[%c0_47, %c0_48] : memref<1x32xf32, #tpu.memory_space<vmem>>, vector<1x32xf32>
      %81 = vector.broadcast %80 : vector<1x32xf32> to vector<16x32xf32>
      %82 = arith.mulf %79, %81 : vector<16x32xf32>
      %c0_49 = arith.constant 0 : index
      %c0_50 = arith.constant 0 : index
      %83 = vector.load %arg15[%c0_49, %c0_50] : memref<32x128xf32, #tpu.memory_space<vmem>>, vector<32x128xf32>
      %cst_51 = arith.constant dense<0.000000e+00> : vector<16x128xf32>
      %84 = tpu.matmul %82, %83, %cst_51 {dimension_numbers = #tpu.dot_dimension_numbers<[1], [0], [0], [1], [0, 0, 1, 1], [], []>} : vector<16x32xf32>, vector<32x128xf32>, vector<16x128xf32> -> vector<16x128xf32>
      %c0_52 = arith.constant 0 : index
      %c0_53 = arith.constant 0 : index
      %85 = vector.load %arg16[%c0_52, %c0_53] : memref<1x128xf32, #tpu.memory_space<vmem>>, vector<1x128xf32>
      %86 = vector.broadcast %85 : vector<1x128xf32> to vector<16x128xf32>
      %87 = arith.addf %84, %86 : vector<16x128xf32>
      %88 = vector.extract_strided_slice %87 {offsets = [0, 0], sizes = [16, 64], strides = [1, 1]} : vector<16x128xf32> to vector<16x64xf32>
      %89 = arith.negf %88 : vector<16x64xf32>
      %90 = math.exp %89 : vector<16x64xf32>
      %cst_54 = arith.constant 1.000000e+00 : f32
      %91 = vector.broadcast %cst_54 : f32 to vector<16x64xf32>
      %92 = arith.addf %91, %90 : vector<16x64xf32>
      %93 = arith.divf %91, %92 : vector<16x64xf32>
      %94 = arith.mulf %93, %78 : vector<16x64xf32>
      %95 = vector.extract_strided_slice %87 {offsets = [0, 64], sizes = [16, 64], strides = [1, 1]} : vector<16x128xf32> to vector<16x64xf32>
      %96 = arith.addf %94, %95 : vector<16x64xf32>
      %c0_55 = arith.constant 0 : index
      %c0_56 = arith.constant 0 : index
      %97 = vector.load %arg17[%c0_55, %c0_56] : memref<64x256xf32, #tpu.memory_space<vmem>>, vector<64x256xf32>
      %cst_57 = arith.constant dense<0.000000e+00> : vector<16x256xf32>
      %98 = tpu.matmul %96, %97, %cst_57 {dimension_numbers = #tpu.dot_dimension_numbers<[1], [0], [0], [1], [0, 0, 1, 1], [], []>} : vector<16x64xf32>, vector<64x256xf32>, vector<16x256xf32> -> vector<16x256xf32>
      %99 = vector.extract_strided_slice %98 {offsets = [0, 0], sizes = [16, 128], strides = [1, 1]} : vector<16x256xf32> to vector<16x128xf32>
      %100 = arith.negf %99 : vector<16x128xf32>
      %101 = math.exp %100 : vector<16x128xf32>
      %cst_58 = arith.constant 1.000000e+00 : f32
      %102 = vector.broadcast %cst_58 : f32 to vector<16x128xf32>
      %103 = arith.addf %102, %101 : vector<16x128xf32>
      %104 = arith.divf %102, %103 : vector<16x128xf32>
      %105 = arith.mulf %99, %104 : vector<16x128xf32>
      %106 = vector.extract_strided_slice %98 {offsets = [0, 128], sizes = [16, 128], strides = [1, 1]} : vector<16x256xf32> to vector<16x128xf32>
      %107 = arith.mulf %105, %106 : vector<16x128xf32>
      %c0_59 = arith.constant 0 : index
      %c0_60 = arith.constant 0 : index
      %108 = vector.load %arg18[%c0_59, %c0_60] : memref<128x64xf32, #tpu.memory_space<vmem>>, vector<128x64xf32>
      %cst_61 = arith.constant dense<0.000000e+00> : vector<16x64xf32>
      %109 = tpu.matmul %107, %108, %cst_61 {dimension_numbers = #tpu.dot_dimension_numbers<[1], [0], [0], [1], [0, 0, 1, 1], [], []>} : vector<16x128xf32>, vector<128x64xf32>, vector<16x64xf32> -> vector<16x64xf32>
      %110 = vector.extract_strided_slice %51 {offsets = [0, 64], sizes = [16, 64], strides = [1, 1]} : vector<16x128xf32> to vector<16x64xf32>
      %111 = arith.negf %110 : vector<16x64xf32>
      %112 = math.exp %111 : vector<16x64xf32>
      %cst_62 = arith.constant 1.000000e+00 : f32
      %113 = vector.broadcast %cst_62 : f32 to vector<16x64xf32>
      %114 = arith.addf %113, %112 : vector<16x64xf32>
      %115 = arith.divf %113, %114 : vector<16x64xf32>
      %116 = arith.mulf %115, %109 : vector<16x64xf32>
      %117 = arith.addf %60, %116 : vector<16x64xf32>
      %c0_63 = arith.constant 0 : index
      %c0_64 = arith.constant 0 : index
      %c0_65 = arith.constant 0 : index
      %118 = vector.load %arg19[%c0_63, %c0_64, %c0_65] : memref<1x16x64xf32, #tpu.memory_space<vmem>>, vector<1x16x64xf32>
      %119 = vector.shape_cast %118 : vector<1x16x64xf32> to vector<16x64xf32>
      %120 = vector.shape_cast %117 : vector<16x64xf32> to vector<1x16x64xf32>
      tpu.vector_store %arg19[%c0_63, %c0_64, %c0_65], %120 {strides = array<i32>} : memref<1x16x64xf32, #tpu.memory_space<vmem>>, vector<1x16x64xf32>,
    } else {
    }
    return
  }
  func.func @transform_0(%arg0: i32, %arg1: i32) -> (i32, i32, i32) {
    %c0_i32 = arith.constant 0 : i32
    %c0_i32_0 = arith.constant 0 : i32
    %c0_i32_1 = arith.constant 0 : i32
    return %arg0, %c0_i32, %c0_i32_0 : i32, i32, i32
  }
  func.func @transform_1(%arg0: i32, %arg1: i32) -> (i32, i32, i32) {
    %c0_i32 = arith.constant 0 : i32
    %c0_i32_0 = arith.constant 0 : i32
    %c0_i32_1 = arith.constant 0 : i32
    return %arg0, %c0_i32, %c0_i32_0 : i32, i32, i32
  }
  func.func @transform_2(%arg0: i32, %arg1: i32) -> (i32, i32, i32, i32) {
    %c0_i32 = arith.constant 0 : i32
    %c0_i32_0 = arith.constant 0 : i32
    %c0_i32_1 = arith.constant 0 : i32
    return %arg0, %arg1, %c0_i32, %c0_i32_0 : i32, i32, i32, i32
  }
  func.func @transform_3(%arg0: i32, %arg1: i32) -> (i32, i32, i32) {
    %c0_i32 = arith.constant 0 : i32
    %c0_i32_0 = arith.constant 0 : i32
    %c0_i32_1 = arith.constant 0 : i32
    return %arg0, %c0_i32, %c0_i32_0 : i32, i32, i32
  }
  func.func @transform_4(%arg0: i32, %arg1: i32) -> (i32, i32) {
    %c0_i32 = arith.constant 0 : i32
    %c0_i32_0 = arith.constant 0 : i32
    %c0_i32_1 = arith.constant 0 : i32
    return %c0_i32, %c0_i32_0 : i32, i32
  }
  func.func @transform_5(%arg0: i32, %arg1: i32) -> (i32, i32) {
    %c0_i32 = arith.constant 0 : i32
    %c0_i32_0 = arith.constant 0 : i32
    %c0_i32_1 = arith.constant 0 : i32
    return %c0_i32, %c0_i32_0 : i32, i32
  }
  func.func @transform_6(%arg0: i32, %arg1: i32) -> (i32, i32) {
    %c0_i32 = arith.constant 0 : i32
    %c0_i32_0 = arith.constant 0 : i32
    %c0_i32_1 = arith.constant 0 : i32
    return %c0_i32, %c0_i32_0 : i32, i32
  }
  func.func @transform_7(%arg0: i32, %arg1: i32) -> (i32, i32) {
    %c0_i32 = arith.constant 0 : i32
    %c0_i32_0 = arith.constant 0 : i32
    %c0_i32_1 = arith.constant 0 : i32
    return %c0_i32, %c0_i32_0 : i32, i32
  }
  func.func @transform_8(%arg0: i32, %arg1: i32) -> (i32, i32) {
    %c0_i32 = arith.constant 0 : i32
    %c0_i32_0 = arith.constant 0 : i32
    %c0_i32_1 = arith.constant 0 : i32
    return %c0_i32, %c0_i32_0 : i32, i32
  }
  func.func @transform_9(%arg0: i32, %arg1: i32) -> (i32, i32, i32) {
    %c0_i32 = arith.constant 0 : i32
    %c0_i32_0 = arith.constant 0 : i32
    %c0_i32_1 = arith.constant 0 : i32
    return %arg1, %c0_i32, %c0_i32_0 : i32, i32, i32
  }
  func.func @transform_10(%arg0: i32, %arg1: i32) -> (i32, i32) {
    %c0_i32 = arith.constant 0 : i32
    %c0_i32_0 = arith.constant 0 : i32
    %c0_i32_1 = arith.constant 0 : i32
    return %c0_i32, %c0_i32_0 : i32, i32
  }
  func.func @transform_11(%arg0: i32, %arg1: i32) -> (i32, i32) {
    %c0_i32 = arith.constant 0 : i32
    %c0_i32_0 = arith.constant 0 : i32
    %c0_i32_1 = arith.constant 0 : i32
    return %c0_i32, %c0_i32_0 : i32, i32
  }
  func.func @transform_12(%arg0: i32, %arg1: i32) -> (i32, i32) {
    %c0_i32 = arith.constant 0 : i32
    %c0_i32_0 = arith.constant 0 : i32
    %c0_i32_1 = arith.constant 0 : i32
    return %c0_i32, %c0_i32_0 : i32, i32
  }
  func.func @transform_13(%arg0: i32, %arg1: i32) -> (i32, i32) {
    %c0_i32 = arith.constant 0 : i32
    %c0_i32_0 = arith.constant 0 : i32
    %c0_i32_1 = arith.constant 0 : i32
    return %c0_i32, %c0_i32_0 : i32, i32
  }
  func.func @transform_14(%arg0: i32, %arg1: i32) -> (i32, i32) {
    %c0_i32 = arith.constant 0 : i32
    %c0_i32_0 = arith.constant 0 : i32
    %c0_i32_1 = arith.constant 0 : i32
    return %c0_i32, %c0_i32_0 : i32, i32
  }
  func.func @transform_15(%arg0: i32, %arg1: i32) -> (i32, i32) {
    %c0_i32 = arith.constant 0 : i32
    %c0_i32_0 = arith.constant 0 : i32
    %c0_i32_1 = arith.constant 0 : i32
    return %c0_i32, %c0_i32_0 : i32, i32
  }
  func.func @transform_16(%arg0: i32, %arg1: i32) -> (i32, i32) {
    %c0_i32 = arith.constant 0 : i32
    %c0_i32_0 = arith.constant 0 : i32
    %c0_i32_1 = arith.constant 0 : i32
    return %c0_i32, %c0_i32_0 : i32, i32
  }
  func.func @transform_17(%arg0: i32, %arg1: i32) -> (i32, i32, i32) {
    %c0_i32 = arith.constant 0 : i32
    %c0_i32_0 = arith.constant 0 : i32
    %c0_i32_1 = arith.constant 0 : i32
    return %arg0, %c0_i32, %c0_i32_0 : i32, i32, i32
  }
}

</mosaic_0001>

<llo_original>
// kernel: tpu_custom_call.1
$region0: #{tpu_custom_call.1}
  #allocation0 [shape = 'u32[]', space=smem, size = 0x4, offset = 0x4, fixed_abs, tag = 'smem constant byte address 0x4 - core index']
  #allocation1 [shape = 'u32[72,128]{1,0:T(1,128)}', space=vmem, size = 0x9000, scoped, tag = 'internal scratch']
  #allocation2 [shape = 'f32[4,16,16]{2,1,0:T(8,128)}', space=vmem, size = 0x8000, scoped, tag = 'scratch operand']
  #allocation3 [shape = 'f32[4,16,16]{2,1,0:T(8,128)}', space=vmem, size = 0x8000, scoped, tag = 'scratch operand']
  #allocation4 [shape = 'f32[4,16,16]{2,1,0:T(8,128)}', space=vmem, size = 0x8000, scoped, tag = 'scratch operand']
  #allocation5 [shape = 'f32[4,16,16]{2,1,0:T(8,128)}', space=vmem, size = 0x8000, scoped, tag = 'scratch operand']
  #allocation6 [shape = 'f32[16,32]{1,0:T(8,128)}', space=vmem, size = 0x2000, scoped, tag = 'scratch operand']
  #allocation7 [shape = 'f32[1,16]{1,0:T(1,128)}', space=vmem, size = 0x200, scoped, tag = 'scratch operand']
  #allocation8 [shape = 'f32[16,64]{1,0:T(8,128)}', space=vmem, size = 0x2000, scoped, tag = 'scratch operand']
  %s0 = inlined_call_operand.hbm [shape: f32[2,16,64], index: 0, kind: input, shape index: {}]
  %s1 = inlined_call_operand.hbm [shape: f32[2,1,16], index: 1, kind: input, shape index: {}]
  %s2 = inlined_call_operand.vmem [shape: f32[2,4,16,16], index: 2, kind: input, shape index: {}]
  %s3 = inlined_call_operand.hbm [shape: f32[2,16,32], index: 3, kind: input, shape index: {}]
  %s4 = inlined_call_operand.vmem [shape: f32[1,32], index: 4, kind: input, shape index: {}]
  %s5 = inlined_call_operand.hbm [shape: f32[32,128], index: 5, kind: input, shape index: {}]
  %s6 = inlined_call_operand.vmem [shape: f32[1,128], index: 6, kind: input, shape index: {}]
  %s7 = inlined_call_operand.hbm [shape: f32[64,256], index: 7, kind: input, shape index: {}]
  %s8 = inlined_call_operand.vmem [shape: f32[1,64], index: 8, kind: input, shape index: {}]
  %s9 = inlined_call_operand.vmem [shape: f32[4,16,64], index: 9, kind: input, shape index: {}]
  %s10 = inlined_call_operand.hbm [shape: f32[32,128], index: 10, kind: input, shape index: {}]
  %s11 = inlined_call_operand.vmem [shape: f32[1,128], index: 11, kind: input, shape index: {}]
  %s12 = inlined_call_operand.vmem [shape: f32[1,32], index: 12, kind: input, shape index: {}]
  %s13 = inlined_call_operand.hbm [shape: f32[32,128], index: 13, kind: input, shape index: {}]
  %s14 = inlined_call_operand.vmem [shape: f32[1,128], index: 14, kind: input, shape index: {}]
  %s15 = inlined_call_operand.hbm [shape: f32[64,256], index: 15, kind: input, shape index: {}]
  %s16 = inlined_call_operand.vmem [shape: f32[128,64], index: 16, kind: input, shape index: {}]
  %s17 = inlined_call_operand.hbm [shape: f32[2,16,64], index: 17, kind: output, shape index: {}]
  %s18 = sld [smem:[#allocation0]]
  $region141: #{tpu_custom_call.1} parent=0
    _
  %s20 = ssub.s32 1, %s18
  %s21 = scalar_select 0, %s20, %s18
  $region1: #{tpu_custom_call.1} parent=0
    #allocation9 [shape = 'u8[16384]{0}', space=vmem, size = 0x4000, scoped, tag = 'input window, operand 0']
    #allocation10 [shape = 's32[2]{0}', space=sflag, size = 0x8, scoped, tag = 'scoped memory for tpu_custom_call.1']
    #allocation11 [shape = 's32[2]{0}', space=sflag, size = 0x8, scoped, tag = 'scoped memory for tpu_custom_call.1']
    #allocation12 [shape = 'u8[1024]{0}', space=vmem, size = 0x400, scoped, tag = 'input window, operand 1']
    #allocation13 [shape = 's32[2]{0}', space=sflag, size = 0x8, scoped, tag = 'scoped memory for tpu_custom_call.1']
    #allocation14 [shape = 'u8[16384]{0}', space=vmem, size = 0x4000, scoped, tag = 'input window, operand 3']
    #allocation15 [shape = 'u8[16384]{0}', space=vmem, size = 0x4000, scoped, tag = 'input window, operand 5, single buffered']
    #allocation16 [shape = 's32[1]{0}', space=sflag, size = 0x4, scoped, tag = 'scoped memory for tpu_custom_call.1']
    #allocation17 [shape = 'u8[65536]{0}', space=vmem, size = 0x10000, scoped, tag = 'input window, operand 7, single buffered']
    #allocation18 [shape = 'u8[16384]{0}', space=vmem, size = 0x4000, scoped, tag = 'input window, operand 10, single buffered']
    #allocation19 [shape = 's32[1]{0}', space=sflag, size = 0x4, scoped, tag = 'scoped memory for tpu_custom_call.1']
    #allocation20 [shape = 'u8[16384]{0}', space=vmem, size = 0x4000, scoped, tag = 'input window, operand 13, single buffered']
    #allocation21 [shape = 'u8[65536]{0}', space=vmem, size = 0x10000, scoped, tag = 'input window, operand 15, single buffered']
    #allocation22 [shape = 's32[1]{0}', space=sflag, size = 0x4, scoped, tag = 'scoped memory for tpu_custom_call.1']
    #allocation23 [shape = 'u8[16384]{0}', space=vmem, size = 0x4000, scoped, tag = 'output window, operand 0']
    %22 = vsyncpa [#allocation10], 0
    %s23 = scalar_lea.sflag [#allocation10], 1
    %24 = vsyncpa %s23, 0
    %25 = vsyncpa [#allocation13], 0
    %s26 = scalar_lea.sflag [#allocation13], 1
    %27 = vsyncpa %s26, 0
    %28 = vsyncpa [#allocation16], 0
    %29 = vsyncpa [#allocation19], 0
    %30 = vsyncpa [#allocation22], 0
    %31 = vsyncpa [#allocation11], 0
    %s32 = scalar_lea.sflag [#allocation11], 1
    %33 = vsyncpa %s32, 0
    loop: start=0, step=1, limit=10
    $region2: #{tpu_custom_call.1} parent=1 // loop_pre_header
      _
    $region3: #{tpu_custom_call.1} parent=1 // loop_header
      %s35 = sphi 0, %s39
      %p36 = scmp.ge.s32.totalorder %s35, 10
      %s42 = sphi 0, %s54
      %s43 = sphi 0, %s50
      %s44 = sphi 0, %s42
      %s45 = sphi 0, %s43
      %s46 = sphi 0, %s44
      %s47 = sphi 0, %s45
      %s57 = sphi 0, %s59
      %s60 = sphi 0, %s57
      %s61 = sphi 0, %s60
      %s77 = sphi 0, %s61
      %s83 = sphi 0, %s85
      %s86 = sphi 0, %s83
      %s87 = sphi 0, %s86
      %s103 = sphi 0, %s87
      %s111 = sphi 0, %s113
      %s114 = sphi 0, %s111
      %s115 = sphi 0, %s114
      %s131 = sphi 0, %s115
      %s137 = sphi 0, %s139
      %s140 = sphi 0, %s137
      %s141 = sphi 0, %s140
      %s157 = sphi 0, %s141
      %s161 = sphi 0, %s161
      %s163 = sphi 0, %s161
      %s164 = sphi 0, %s163
      %s178 = sphi 0, %s164
      %s182 = sphi 0, %s182
      %s184 = sphi 0, %s182
      %s185 = sphi 0, %s184
      %s199 = sphi 0, %s185
      %s203 = sphi 0, %s203
      %s205 = sphi 0, %s203
      %s206 = sphi 0, %s205
      %s220 = sphi 0, %s206
      %s224 = sphi 0, %s224
      %s226 = sphi 0, %s224
      %s227 = sphi 0, %s226
      %s241 = sphi 0, %s227
      %s245 = sphi 0, %s245
      %s247 = sphi 0, %s245
      %s248 = sphi 0, %s247
      %s262 = sphi 0, %s248
      %s268 = sphi 0, %s270
      %s271 = sphi 0, %s268
      %s272 = sphi 0, %s271
      %s288 = sphi 0, %s272
      %s292 = sphi 0, %s292
      %s294 = sphi 0, %s292
      %s295 = sphi 0, %s294
      %s309 = sphi 0, %s295
      %s313 = sphi 0, %s313
      %s315 = sphi 0, %s313
      %s316 = sphi 0, %s315
      %s330 = sphi 0, %s316
      %s334 = sphi 0, %s334
      %s336 = sphi 0, %s334
      %s337 = sphi 0, %s336
      %s351 = sphi 0, %s337
      %s355 = sphi 0, %s355
      %s357 = sphi 0, %s355
      %s358 = sphi 0, %s357
      %s372 = sphi 0, %s358
      %s376 = sphi 0, %s376
      %s378 = sphi 0, %s376
      %s379 = sphi 0, %s378
      %s393 = sphi 0, %s379
      %s397 = sphi 0, %s397
      %s399 = sphi 0, %s397
      %s400 = sphi 0, %s399
      %s414 = sphi 0, %s400
      %s418 = sphi 0, %s418
      %s420 = sphi 0, %s418
      %s421 = sphi 0, %s420
      %s435 = sphi 0, %s421
      %s441 = sphi 0, %s443
      %s444 = sphi 0, %s441
      %s445 = sphi 0, %s444
      %s461 = sphi 0, %s445
    $region4: #{tpu_custom_call.1} parent=1 // loop_header_branch
      %38 = sbr.rel (%p36) target = $region8
    $region5: #{tpu_custom_call.1} parent=1 // loop_body
      %s40 = ssub.s32 %s35, 1
      %s41 = ssub.s32 %s35, 2
      %s48 = sadd.s32 1, %s43
      %p49 = scmp.ge.s32.totalorder %s48, 4
      %s50 = scalar_select %p49, 0, %s48
      %s51 = sadd.s32 1, %s42
      %s52 = scalar_select %p49, %s51, %s42
      %p53 = scmp.ge.s32.totalorder %s52, 2
      %s54 = scalar_select %p53, 0, %s52
      %s55 = ssub.s32 %s42, %s54
      %p56 = scmp.eq.s32.totalorder %s55, 0
      %s58 = sadd.s32 %s57, 1
      %s59 = scalar_select %p56, %s57, %s58
      %p62 = pneg %p56
      %p63 = scmp.eq.s32.totalorder %s35, 7
      %p64 = por %p62, %p63
      %p65 = scmp.ne.s32.totalorder %s57, %s60
      %p66 = scmp.eq.s32.totalorder %s35, 0
      %p67 = por %p65, %p66
      %p68 = scmp.ne.s32.totalorder %s57, %s60
      %p69 = scmp.eq.s32.totalorder %s40, 7
      %p70 = por %p68, %p69
      %p71 = scmp.ne.s32.totalorder %s60, %s61
      %p72 = scmp.eq.s32.totalorder %s40, 0
      %p73 = por %p71, %p72
      %p74 = scmp.ne.s32.totalorder %s60, %s61
      %p75 = scmp.eq.s32.totalorder %s41, 7
      %p76 = por %p74, %p75
      %p78 = scmp.ne.s32.totalorder %s61, %s77
      %p79 = scmp.eq.s32.totalorder %s41, 0
      %p80 = por %p78, %p79
      %s81 = ssub.s32 %s42, %s54
      %p82 = scmp.eq.s32.totalorder %s81, 0
      %s84 = sadd.s32 %s83, 1
      %s85 = scalar_select %p82, %s83, %s84
      %p88 = pneg %p82
      %p89 = scmp.eq.s32.totalorder %s35, 7
      %p90 = por %p88, %p89
      %p91 = scmp.ne.s32.totalorder %s83, %s86
      %p92 = scmp.eq.s32.totalorder %s35, 0
      %p93 = por %p91, %p92
      %p94 = scmp.ne.s32.totalorder %s83, %s86
      %p95 = scmp.eq.s32.totalorder %s40, 7
      %p96 = por %p94, %p95
      %p97 = scmp.ne.s32.totalorder %s86, %s87
      %p98 = scmp.eq.s32.totalorder %s40, 0
      %p99 = por %p97, %p98
      %p100 = scmp.ne.s32.totalorder %s86, %s87
      %p101 = scmp.eq.s32.totalorder %s41, 7
      %p102 = por %p100, %p101
      %p104 = scmp.ne.s32.totalorder %s87, %s103
      %p105 = scmp.eq.s32.totalorder %s41, 0
      %p106 = por %p104, %p105
      %s107 = ssub.s32 %s42, %s54
      %s108 = ssub.s32 %s43, %s50
      %s109 = sor.u32 %s107, %s108
      %p110 = scmp.eq.s32.totalorder %s109, 0
      %s112 = sadd.s32 %s111, 1
      %s113 = scalar_select %p110, %s111, %s112
      %p116 = pneg %p110
      %p117 = scmp.eq.s32.totalorder %s35, 7
      %p118 = por %p116, %p117
      %p119 = scmp.ne.s32.totalorder %s111, %s114
      %p120 = scmp.eq.s32.totalorder %s35, 0
      %p121 = por %p119, %p120
      %p122 = scmp.ne.s32.totalorder %s111, %s114
      %p123 = scmp.eq.s32.totalorder %s40, 7
      %p124 = por %p122, %p123
      %p125 = scmp.ne.s32.totalorder %s114, %s115
      %p126 = scmp.eq.s32.totalorder %s40, 0
      %p127 = por %p125, %p126
      %p128 = scmp.ne.s32.totalorder %s114, %s115
      %p129 = scmp.eq.s32.totalorder %s41, 7
      %p130 = por %p128, %p129
      %p132 = scmp.ne.s32.totalorder %s115, %s131
      %p133 = scmp.eq.s32.totalorder %s41, 0
      %p134 = por %p132, %p133
      %s135 = ssub.s32 %s42, %s54
      %p136 = scmp.eq.s32.totalorder %s135, 0
      %s138 = sadd.s32 %s137, 1
      %s139 = scalar_select %p136, %s137, %s138
      %p142 = pneg %p136
      %p143 = scmp.eq.s32.totalorder %s35, 7
      %p144 = por %p142, %p143
      %p145 = scmp.ne.s32.totalorder %s137, %s140
      %p146 = scmp.eq.s32.totalorder %s35, 0
      %p147 = por %p145, %p146
      %p148 = scmp.ne.s32.totalorder %s137, %s140
      %p149 = scmp.eq.s32.totalorder %s40, 7
      %p150 = por %p148, %p149
      %p151 = scmp.ne.s32.totalorder %s140, %s141
      %p152 = scmp.eq.s32.totalorder %s40, 0
      %p153 = por %p151, %p152
      %p154 = scmp.ne.s32.totalorder %s140, %s141
      %p155 = scmp.eq.s32.totalorder %s41, 7
      %p156 = por %p154, %p155
      %p158 = scmp.ne.s32.totalorder %s141, %s157
      %p159 = scmp.eq.s32.totalorder %s41, 0
      %p160 = por %p158, %p159
      %s162 = sadd.s32 %s161, 1
      %p165 = scmp.eq.s32.totalorder %s35, 7
      %p166 = scmp.ne.s32.totalorder %s161, %s163
      %p167 = scmp.eq.s32.totalorder %s35, 0
      %p168 = por %p166, %p167
      %p169 = scmp.ne.s32.totalorder %s161, %s163
      %p170 = scmp.eq.s32.totalorder %s40, 7
      %p171 = por %p169, %p170
      %p172 = scmp.ne.s32.totalorder %s163, %s164
      %p173 = scmp.eq.s32.totalorder %s40, 0
      %p174 = por %p172, %p173
      %p175 = scmp.ne.s32.totalorder %s163, %s164
      %p176 = scmp.eq.s32.totalorder %s41, 7
      %p177 = por %p175, %p176
      %p179 = scmp.ne.s32.totalorder %s164, %s178
      %p180 = scmp.eq.s32.totalorder %s41, 0
      %p181 = por %p179, %p180
      %s183 = sadd.s32 %s182, 1
      %p186 = scmp.eq.s32.totalorder %s35, 7
      %p187 = scmp.ne.s32.totalorder %s182, %s184
      %p188 = scmp.eq.s32.totalorder %s35, 0
      %p189 = por %p187, %p188
      %p190 = scmp.ne.s32.totalorder %s182, %s184
      %p191 = scmp.eq.s32.totalorder %s40, 7
      %p192 = por %p190, %p191
      %p193 = scmp.ne.s32.totalorder %s184, %s185
      %p194 = scmp.eq.s32.totalorder %s40, 0
      %p195 = por %p193, %p194
      %p196 = scmp.ne.s32.totalorder %s184, %s185
      %p197 = scmp.eq.s32.totalorder %s41, 7
      %p198 = por %p196, %p197
      %p200 = scmp.ne.s32.totalorder %s185, %s199
      %p201 = scmp.eq.s32.totalorder %s41, 0
      %p202 = por %p200, %p201
      %s204 = sadd.s32 %s203, 1
      %p207 = scmp.eq.s32.totalorder %s35, 7
      %p208 = scmp.ne.s32.totalorder %s203, %s205
      %p209 = scmp.eq.s32.totalorder %s35, 0
      %p210 = por %p208, %p209
      %p211 = scmp.ne.s32.totalorder %s203, %s205
      %p212 = scmp.eq.s32.totalorder %s40, 7
      %p213 = por %p211, %p212
      %p214 = scmp.ne.s32.totalorder %s205, %s206
      %p215 = scmp.eq.s32.totalorder %s40, 0
      %p216 = por %p214, %p215
      %p217 = scmp.ne.s32.totalorder %s205, %s206
      %p218 = scmp.eq.s32.totalorder %s41, 7
      %p219 = por %p217, %p218
      %p221 = scmp.ne.s32.totalorder %s206, %s220
      %p222 = scmp.eq.s32.totalorder %s41, 0
      %p223 = por %p221, %p222
      %s225 = sadd.s32 %s224, 1
      %p228 = scmp.eq.s32.totalorder %s35, 7
      %p229 = scmp.ne.s32.totalorder %s224, %s226
      %p230 = scmp.eq.s32.totalorder %s35, 0
      %p231 = por %p229, %p230
      %p232 = scmp.ne.s32.totalorder %s224, %s226
      %p233 = scmp.eq.s32.totalorder %s40, 7
      %p234 = por %p232, %p233
      %p235 = scmp.ne.s32.totalorder %s226, %s227
      %p236 = scmp.eq.s32.totalorder %s40, 0
      %p237 = por %p235, %p236
      %p238 = scmp.ne.s32.totalorder %s226, %s227
      %p239 = scmp.eq.s32.totalorder %s41, 7
      %p240 = por %p238, %p239
      %p242 = scmp.ne.s32.totalorder %s227, %s241
      %p243 = scmp.eq.s32.totalorder %s41, 0
      %p244 = por %p242, %p243
      %s246 = sadd.s32 %s245, 1
      %p249 = scmp.eq.s32.totalorder %s35, 7
      %p250 = scmp.ne.s32.totalorder %s245, %s247
      %p251 = scmp.eq.s32.totalorder %s35, 0
      %p252 = por %p250, %p251
      %p253 = scmp.ne.s32.totalorder %s245, %s247
      %p254 = scmp.eq.s32.totalorder %s40, 7
      %p255 = por %p253, %p254
      %p256 = scmp.ne.s32.totalorder %s247, %s248
      %p257 = scmp.eq.s32.totalorder %s40, 0
      %p258 = por %p256, %p257
      %p259 = scmp.ne.s32.totalorder %s247, %s248
      %p260 = scmp.eq.s32.totalorder %s41, 7
      %p261 = por %p259, %p260
      %p263 = scmp.ne.s32.totalorder %s248, %s262
      %p264 = scmp.eq.s32.totalorder %s41, 0
      %p265 = por %p263, %p264
      %s266 = ssub.s32 %s43, %s50
      %p267 = scmp.eq.s32.totalorder %s266, 0
      %s269 = sadd.s32 %s268, 1
      %s270 = scalar_select %p267, %s268, %s269
      %p273 = pneg %p267
      %p274 = scmp.eq.s32.totalorder %s35, 7
      %p275 = por %p273, %p274
      %p276 = scmp.ne.s32.totalorder %s268, %s271
      %p277 = scmp.eq.s32.totalorder %s35, 0
      %p278 = por %p276, %p277
      %p279 = scmp.ne.s32.totalorder %s268, %s271
      %p280 = scmp.eq.s32.totalorder %s40, 7
      %p281 = por %p279, %p280
      %p282 = scmp.ne.s32.totalorder %s271, %s272
      %p283 = scmp.eq.s32.totalorder %s40, 0
      %p284 = por %p282, %p283
      %p285 = scmp.ne.s32.totalorder %s271, %s272
      %p286 = scmp.eq.s32.totalorder %s41, 7
      %p287 = por %p285, %p286
      %p289 = scmp.ne.s32.totalorder %s272, %s288
      %p290 = scmp.eq.s32.totalorder %s41, 0
      %p291 = por %p289, %p290
      %s293 = sadd.s32 %s292, 1
      %p296 = scmp.eq.s32.totalorder %s35, 7
      %p297 = scmp.ne.s32.totalorder %s292, %s294
      %p298 = scmp.eq.s32.totalorder %s35, 0
      %p299 = por %p297, %p298
      %p300 = scmp.ne.s32.totalorder %s292, %s294
      %p301 = scmp.eq.s32.totalorder %s40, 7
      %p302 = por %p300, %p301
      %p303 = scmp.ne.s32.totalorder %s294, %s295
      %p304 = scmp.eq.s32.totalorder %s40, 0
      %p305 = por %p303, %p304
      %p306 = scmp.ne.s32.totalorder %s294, %s295
      %p307 = scmp.eq.s32.totalorder %s41, 7
      %p308 = por %p306, %p307
      %p310 = scmp.ne.s32.totalorder %s295, %s309
      %p311 = scmp.eq.s32.totalorder %s41, 0
      %p312 = por %p310, %p311
      %s314 = sadd.s32 %s313, 1
      %p317 = scmp.eq.s32.totalorder %s35, 7
      %p318 = scmp.ne.s32.totalorder %s313, %s315
      %p319 = scmp.eq.s32.totalorder %s35, 0
      %p320 = por %p318, %p319
      %p321 = scmp.ne.s32.totalorder %s313, %s315
      %p322 = scmp.eq.s32.totalorder %s40, 7
      %p323 = por %p321, %p322
      %p324 = scmp.ne.s32.totalorder %s315, %s316
      %p325 = scmp.eq.s32.totalorder %s40, 0
      %p326 = por %p324, %p325
      %p327 = scmp.ne.s32.totalorder %s315, %s316
      %p328 = scmp.eq.s32.totalorder %s41, 7
      %p329 = por %p327, %p328
      %p331 = scmp.ne.s32.totalorder %s316, %s330
      %p332 = scmp.eq.s32.totalorder %s41, 0
      %p333 = por %p331, %p332
      %s335 = sadd.s32 %s334, 1
      %p338 = scmp.eq.s32.totalorder %s35, 7
      %p339 = scmp.ne.s32.totalorder %s334, %s336
      %p340 = scmp.eq.s32.totalorder %s35, 0
      %p341 = por %p339, %p340
      %p342 = scmp.ne.s32.totalorder %s334, %s336
      %p343 = scmp.eq.s32.totalorder %s40, 7
      %p344 = por %p342, %p343
      %p345 = scmp.ne.s32.totalorder %s336, %s337
      %p346 = scmp.eq.s32.totalorder %s40, 0
      %p347 = por %p345, %p346
      %p348 = scmp.ne.s32.totalorder %s336, %s337
      %p349 = scmp.eq.s32.totalorder %s41, 7
      %p350 = por %p348, %p349
      %p352 = scmp.ne.s32.totalorder %s337, %s351
      %p353 = scmp.eq.s32.totalorder %s41, 0
      %p354 = por %p352, %p353
      %s356 = sadd.s32 %s355, 1
      %p359 = scmp.eq.s32.totalorder %s35, 7
      %p360 = scmp.ne.s32.totalorder %s355, %s357
      %p361 = scmp.eq.s32.totalorder %s35, 0
      %p362 = por %p360, %p361
      %p363 = scmp.ne.s32.totalorder %s355, %s357
      %p364 = scmp.eq.s32.totalorder %s40, 7
      %p365 = por %p363, %p364
      %p366 = scmp.ne.s32.totalorder %s357, %s358
      %p367 = scmp.eq.s32.totalorder %s40, 0
      %p368 = por %p366, %p367
      %p369 = scmp.ne.s32.totalorder %s357, %s358
      %p370 = scmp.eq.s32.totalorder %s41, 7
      %p371 = por %p369, %p370
      %p373 = scmp.ne.s32.totalorder %s358, %s372
      %p374 = scmp.eq.s32.totalorder %s41, 0
      %p375 = por %p373, %p374
      %s377 = sadd.s32 %s376, 1
      %p380 = scmp.eq.s32.totalorder %s35, 7
      %p381 = scmp.ne.s32.totalorder %s376, %s378
      %p382 = scmp.eq.s32.totalorder %s35, 0
      %p383 = por %p381, %p382
      %p384 = scmp.ne.s32.totalorder %s376, %s378
      %p385 = scmp.eq.s32.totalorder %s40, 7
      %p386 = por %p384, %p385
      %p387 = scmp.ne.s32.totalorder %s378, %s379
      %p388 = scmp.eq.s32.totalorder %s40, 0
      %p389 = por %p387, %p388
      %p390 = scmp.ne.s32.totalorder %s378, %s379
      %p391 = scmp.eq.s32.totalorder %s41, 7
      %p392 = por %p390, %p391
      %p394 = scmp.ne.s32.totalorder %s379, %s393
      %p395 = scmp.eq.s32.totalorder %s41, 0
      %p396 = por %p394, %p395
      %s398 = sadd.s32 %s397, 1
      %p401 = scmp.eq.s32.totalorder %s35, 7
      %p402 = scmp.ne.s32.totalorder %s397, %s399
      %p403 = scmp.eq.s32.totalorder %s35, 0
      %p404 = por %p402, %p403
      %p405 = scmp.ne.s32.totalorder %s397, %s399
      %p406 = scmp.eq.s32.totalorder %s40, 7
      %p407 = por %p405, %p406
      %p408 = scmp.ne.s32.totalorder %s399, %s400
      %p409 = scmp.eq.s32.totalorder %s40, 0
      %p410 = por %p408, %p409
      %p411 = scmp.ne.s32.totalorder %s399, %s400
      %p412 = scmp.eq.s32.totalorder %s41, 7
      %p413 = por %p411, %p412
      %p415 = scmp.ne.s32.totalorder %s400, %s414
      %p416 = scmp.eq.s32.totalorder %s41, 0
      %p417 = por %p415, %p416
      %s419 = sadd.s32 %s418, 1
      %p422 = scmp.eq.s32.totalorder %s35, 7
      %p423 = scmp.ne.s32.totalorder %s418, %s420
      %p424 = scmp.eq.s32.totalorder %s35, 0
      %p425 = por %p423, %p424
      %p426 = scmp.ne.s32.totalorder %s418, %s420
      %p427 = scmp.eq.s32.totalorder %s40, 7
      %p428 = por %p426, %p427
      %p429 = scmp.ne.s32.totalorder %s420, %s421
      %p430 = scmp.eq.s32.totalorder %s40, 0
      %p431 = por %p429, %p430
      %p432 = scmp.ne.s32.totalorder %s420, %s421
      %p433 = scmp.eq.s32.totalorder %s41, 7
      %p434 = por %p432, %p433
      %p436 = scmp.ne.s32.totalorder %s421, %s435
      %p437 = scmp.eq.s32.totalorder %s41, 0
      %p438 = por %p436, %p437
      %s439 = ssub.s32 %s42, %s54
      %p440 = scmp.eq.s32.totalorder %s439, 0
      %s442 = sadd.s32 %s441, 1
      %s443 = scalar_select %p440, %s441, %s442
      %p446 = pneg %p440
      %p447 = scmp.eq.s32.totalorder %s35, 7
      %p448 = por %p446, %p447
      %p449 = scmp.ne.s32.totalorder %s441, %s444
      %p450 = scmp.eq.s32.totalorder %s35, 0
      %p451 = por %p449, %p450
      %p452 = scmp.ne.s32.totalorder %s441, %s444
      %p453 = scmp.eq.s32.totalorder %s40, 7
      %p454 = por %p452, %p453
      %p455 = scmp.ne.s32.totalorder %s444, %s445
      %p456 = scmp.eq.s32.totalorder %s40, 0
      %p457 = por %p455, %p456
      %p458 = scmp.ne.s32.totalorder %s444, %s445
      %p459 = scmp.eq.s32.totalorder %s41, 7
      %p460 = por %p458, %p459
      %p462 = scmp.ne.s32.totalorder %s445, %s461
      %p463 = scmp.eq.s32.totalorder %s41, 0
      %p464 = por %p462, %p463
      %p465 = scmp.le.s32.totalorder 1, %s35
      %p466 = scmp.lt.s32.totalorder %s35, 9
      %p467 = pnand %p465, %p466
      %p468 = pneg %p467
      // Predicated region
      $region9: #{tpu_custom_call.1} parent=5 // pred_check
        _
      $region10: #{tpu_custom_call.1} parent=5 // pred_check_branch
        %470 = sbr.rel (%p467) target = $region12
      $region11: #{tpu_custom_call.1} parent=5 // pred_region
        %s471 = ssub.s32 %s35, 1
        // Predicated region
        $region13: #{tpu_custom_call.1} parent=11 // pred_check
          %p472 = pneg %p174
        $region14: #{tpu_custom_call.1} parent=11 // pred_check_branch
          %474 = sbr.rel (%p472) target = $region16
        $region15: #{tpu_custom_call.1} parent=11 // pred_region
          _
        $region16: #{tpu_custom_call.1} parent=11 // pred_fallthru
          _
        // Predicated region
        $region17: #{tpu_custom_call.1} parent=11 // pred_check
          %p475 = pneg %p195
        $region18: #{tpu_custom_call.1} parent=11 // pred_check_branch
          %477 = sbr.rel (%p475) target = $region20
        $region19: #{tpu_custom_call.1} parent=11 // pred_region
          %479 = vsyncadd [#allocation16], 0
          %s480 = sshll.u32 %s5, 4
          %s481 = int_to_ptr.hbm [resolvable:$true] %s480
          %s482 = sshll.u32 [#allocation15], 4
          %s483 = int_to_ptr.vmem [resolvable:$true] %s482
          %488 = dma.hbm_to_vmem [thread:$0]  %s481, 512, %s483, [#allocation16], 128, 128, 8
        $region20: #{tpu_custom_call.1} parent=11 // pred_fallthru
          _
        // Predicated region
        $region21: #{tpu_custom_call.1} parent=11 // pred_check
          %p489 = pneg %p216
        $region22: #{tpu_custom_call.1} parent=11 // pred_check_branch
          %491 = sbr.rel (%p489) target = $region24
        $region23: #{tpu_custom_call.1} parent=11 // pred_region
          _
        $region24: #{tpu_custom_call.1} parent=11 // pred_fallthru
          _
        // Predicated region
        $region25: #{tpu_custom_call.1} parent=11 // pred_check
          %p492 = pneg %p237
        $region26: #{tpu_custom_call.1} parent=11 // pred_check_branch
          %494 = sbr.rel (%p492) target = $region28
        $region27: #{tpu_custom_call.1} parent=11 // pred_region
          %496 = vsyncadd [#allocation16], 0
          %s497 = sshll.u32 %s7, 4
          %s498 = int_to_ptr.hbm [resolvable:$true] %s497
          %s499 = sshll.u32 [#allocation17], 4
          %s500 = int_to_ptr.vmem [resolvable:$true] %s499
          %505 = dma.hbm_to_vmem [thread:$0]  %s498, 2048, %s500, [#allocation16], 256, 256, 16
        $region28: #{tpu_custom_call.1} parent=11 // pred_fallthru
          _
        // Predicated region
        $region29: #{tpu_custom_call.1} parent=11 // pred_check
          %p506 = pneg %p258
        $region30: #{tpu_custom_call.1} parent=11 // pred_check_branch
          %508 = sbr.rel (%p506) target = $region32
        $region31: #{tpu_custom_call.1} parent=11 // pred_region
          _
        $region32: #{tpu_custom_call.1} parent=11 // pred_fallthru
          _
        // Predicated region
        $region33: #{tpu_custom_call.1} parent=11 // pred_check
          %p509 = pneg %p305
        $region34: #{tpu_custom_call.1} parent=11 // pred_check_branch
          %511 = sbr.rel (%p509) target = $region36
        $region35: #{tpu_custom_call.1} parent=11 // pred_region
          %513 = vsyncadd [#allocation19], 0
          %s514 = sshll.u32 %s10, 4
          %s515 = int_to_ptr.hbm [resolvable:$true] %s514
          %s516 = sshll.u32 [#allocation18], 4
          %s517 = int_to_ptr.vmem [resolvable:$true] %s516
          %522 = dma.hbm_to_vmem [thread:$0]  %s515, 512, %s517, [#allocation19], 128, 128, 8
        $region36: #{tpu_custom_call.1} parent=11 // pred_fallthru
          _
        // Predicated region
        $region37: #{tpu_custom_call.1} parent=11 // pred_check
          %p523 = pneg %p326
        $region38: #{tpu_custom_call.1} parent=11 // pred_check_branch
          %525 = sbr.rel (%p523) target = $region40
        $region39: #{tpu_custom_call.1} parent=11 // pred_region
          _
        $region40: #{tpu_custom_call.1} parent=11 // pred_fallthru
          _
        // Predicated region
        $region41: #{tpu_custom_call.1} parent=11 // pred_check
          %p526 = pneg %p347
        $region42: #{tpu_custom_call.1} parent=11 // pred_check_branch
          %528 = sbr.rel (%p526) target = $region44
        $region43: #{tpu_custom_call.1} parent=11 // pred_region
          _
        $region44: #{tpu_custom_call.1} parent=11 // pred_fallthru
          _
        // Predicated region
        $region45: #{tpu_custom_call.1} parent=11 // pred_check
          %p529 = pneg %p368
        $region46: #{tpu_custom_call.1} parent=11 // pred_check_branch
          %531 = sbr.rel (%p529) target = $region48
        $region47: #{tpu_custom_call.1} parent=11 // pred_region
          %533 = vsyncadd [#allocation19], 0
          %s534 = sshll.u32 %s13, 4
          %s535 = int_to_ptr.hbm [resolvable:$true] %s534
          %s536 = sshll.u32 [#allocation20], 4
          %s537 = int_to_ptr.vmem [resolvable:$true] %s536
          %542 = dma.hbm_to_vmem [thread:$0]  %s535, 512, %s537, [#allocation19], 128, 128, 8
        $region48: #{tpu_custom_call.1} parent=11 // pred_fallthru
          _
        // Predicated region
        $region49: #{tpu_custom_call.1} parent=11 // pred_check
          %p543 = pneg %p389
        $region50: #{tpu_custom_call.1} parent=11 // pred_check_branch
          %545 = sbr.rel (%p543) target = $region52
        $region51: #{tpu_custom_call.1} parent=11 // pred_region
          _
        $region52: #{tpu_custom_call.1} parent=11 // pred_fallthru
          _
        // Predicated region
        $region53: #{tpu_custom_call.1} parent=11 // pred_check
          %p546 = pneg %p410
        $region54: #{tpu_custom_call.1} parent=11 // pred_check_branch
          %548 = sbr.rel (%p546) target = $region56
        $region55: #{tpu_custom_call.1} parent=11 // pred_region
          %550 = vsyncadd [#allocation22], 0
          %s551 = sshll.u32 %s15, 4
          %s552 = int_to_ptr.hbm [resolvable:$true] %s551
          %s553 = sshll.u32 [#allocation21], 4
          %s554 = int_to_ptr.vmem [resolvable:$true] %s553
          %559 = dma.hbm_to_vmem [thread:$0]  %s552, 2048, %s554, [#allocation22], 256, 256, 16
        $region56: #{tpu_custom_call.1} parent=11 // pred_fallthru
          _
        // Predicated region
        $region57: #{tpu_custom_call.1} parent=11 // pred_check
          %p560 = pneg %p431
        $region58: #{tpu_custom_call.1} parent=11 // pred_check_branch
          %562 = sbr.rel (%p560) target = $region60
        $region59: #{tpu_custom_call.1} parent=11 // pred_region
          _
        $region60: #{tpu_custom_call.1} parent=11 // pred_fallthru
          _
      $region12: #{tpu_custom_call.1} parent=5 // pred_fallthru
        _
      %p563 = scmp.lt.s32.totalorder %s35, 8
      // Predicated region
      $region61: #{tpu_custom_call.1} parent=5 // pred_check
        %p564 = pneg %p563
      $region62: #{tpu_custom_call.1} parent=5 // pred_check_branch
        %566 = sbr.rel (%p564) target = $region64
      $region63: #{tpu_custom_call.1} parent=5 // pred_region
        // Predicated region
        $region65: #{tpu_custom_call.1} parent=63 // pred_check
          %p567 = pneg %p67
        $region66: #{tpu_custom_call.1} parent=63 // pred_check_branch
          %569 = sbr.rel (%p567) target = $region68
        $region67: #{tpu_custom_call.1} parent=63 // pred_region
          %s570 = sand.u32 %s57, 1
          %s571 = scalar_lea.sflag [#allocation10], %s570
          %s572 = sand.u32 %s57, 1
          %s573 = smul.addr %s572, 16
          %s574 = scalar_lea.vmem [#allocation9], %s573
          %576 = vsyncadd %s571, 0
          %s577 = smul.addr %s42, 2
          %s578 = smul.addr %s577, 8
          %s579 = scalar_lea.hbm %s0, %s578
          %s580 = sshll.u32 %s579, 4
          %s581 = int_to_ptr.hbm [resolvable:$true] %s580
          %s582 = sshll.u32 %s574, 4
          %s583 = int_to_ptr.vmem [resolvable:$true] %s582
          %588 = dma.hbm_to_vmem [thread:$0]  %s581, 256, %s583, %s571, 128, 128, 8
        $region68: #{tpu_custom_call.1} parent=63 // pred_fallthru
          _
        // Predicated region
        $region69: #{tpu_custom_call.1} parent=63 // pred_check
          %p589 = pneg %p93
        $region70: #{tpu_custom_call.1} parent=63 // pred_check_branch
          %591 = sbr.rel (%p589) target = $region72
        $region71: #{tpu_custom_call.1} parent=63 // pred_region
          %s592 = sand.u32 %s35, 1
          %s593 = scalar_lea.sflag [#allocation13], %s592
          %s594 = sand.u32 %s83, 1
          %s595 = scalar_lea.vmem [#allocation12], %s594
          %597 = vsyncadd %s593, 0
          %s598 = scalar_lea.hbm %s1, %s42
          %s600 = sshll.u32 %s598, 4
          %s601 = int_to_ptr.hbm [resolvable:$true] %s600
          %s602 = sshll.u32 %s595, 4
          %s603 = int_to_ptr.vmem [resolvable:$true] %s602
          %605 = dma.hbm_to_vmem [thread:$0]  %s601, 16, %s603, %s593
        $region72: #{tpu_custom_call.1} parent=63 // pred_fallthru
          _
        // Predicated region
        $region73: #{tpu_custom_call.1} parent=63 // pred_check
          %p606 = pneg %p121
        $region74: #{tpu_custom_call.1} parent=63 // pred_check_branch
          %608 = sbr.rel (%p606) target = $region76
        $region75: #{tpu_custom_call.1} parent=63 // pred_region
          %p609 = scmp.lt.s32.totalorder %s42, 1
          %s610 = scalar_select %p609, %s42, 1
          %p611 = scmp.lt.s32.totalorder %s43, 3
          %s612 = scalar_select %p611, %s43, 3
          %s613 = smul.addr %s612, 2
          %s614 = smul.addr %s610, 8
          %s615 = sadd.s32 %s613, %s614
          %s616 = smul.addr %s615, 8
          %s617 = scalar_lea.vmem %s2, %s616
        $region76: #{tpu_custom_call.1} parent=63 // pred_fallthru
          _
        // Predicated region
        $region77: #{tpu_custom_call.1} parent=63 // pred_check
          %p618 = pneg %p147
        $region78: #{tpu_custom_call.1} parent=63 // pred_check_branch
          %620 = sbr.rel (%p618) target = $region80
        $region79: #{tpu_custom_call.1} parent=63 // pred_region
          %s621 = sand.u32 %s35, 1
          %s622 = scalar_lea.sflag [#allocation13], %s621
          %s623 = sand.u32 %s137, 1
          %s624 = smul.addr %s623, 16
          %s625 = scalar_lea.vmem [#allocation14], %s624
          %627 = vsyncadd %s622, 0
          %s628 = smul.addr %s42, 2
          %s629 = smul.addr %s628, 8
          %s630 = scalar_lea.hbm %s3, %s629
          %s631 = sshll.u32 %s630, 4
          %s632 = int_to_ptr.hbm [resolvable:$true] %s631
          %s633 = sshll.u32 %s625, 4
          %s634 = int_to_ptr.vmem [resolvable:$true] %s633
          %639 = dma.hbm_to_vmem [thread:$0]  %s632, 256, %s634, %s622, 128, 128, 8
        $region80: #{tpu_custom_call.1} parent=63 // pred_fallthru
          _
        // Predicated region
        $region81: #{tpu_custom_call.1} parent=63 // pred_check
          %p640 = pneg %p278
        $region82: #{tpu_custom_call.1} parent=63 // pred_check_branch
          %642 = sbr.rel (%p640) target = $region84
        $region83: #{tpu_custom_call.1} parent=63 // pred_region
          %p643 = scmp.lt.s32.totalorder %s43, 3
          %s644 = scalar_select %p643, %s43, 3
          %s645 = smul.addr %s644, 2
          %s646 = smul.addr %s645, 8
          %s647 = scalar_lea.vmem %s9, %s646
        $region84: #{tpu_custom_call.1} parent=63 // pred_fallthru
          _
      $region64: #{tpu_custom_call.1} parent=5 // pred_fallthru
        _
      %p648 = scmp.le.s32.totalorder 1, %s35
      %p649 = scmp.lt.s32.totalorder %s35, 9
      %p650 = pnand %p648, %p649
      %p651 = pneg %p650
      // Predicated region
      $region85: #{tpu_custom_call.1} parent=5 // pred_check
        _
      $region86: #{tpu_custom_call.1} parent=5 // pred_check_branch
        %653 = sbr.rel (%p650) target = $region88
      $region87: #{tpu_custom_call.1} parent=5 // pred_region
        %s654 = ssub.s32 %s35, 1
        %s655 = sand.u32 %s60, 1
        %s656 = scalar_lea.sflag [#allocation10], %s655
        %s657 = sand.u32 %s60, 1
        %s658 = smul.addr %s657, 16
        %s659 = scalar_lea.vmem [#allocation9], %s658
        // Predicated region
        $region89: #{tpu_custom_call.1} parent=87 // pred_check
          %p660 = pneg %p73
        $region90: #{tpu_custom_call.1} parent=87 // pred_check_branch
          %662 = sbr.rel (%p660) target = $region92
        $region91: #{tpu_custom_call.1} parent=87 // pred_region
          %664 = dma.done %s656, 256
        $region92: #{tpu_custom_call.1} parent=87 // pred_fallthru
          _
        %s665 = sand.u32 %s40, 1
        %s666 = scalar_lea.sflag [#allocation13], %s665
        %s667 = sand.u32 %s86, 1
        %s668 = scalar_lea.vmem [#allocation12], %s667
        // Predicated region
        $region93: #{tpu_custom_call.1} parent=87 // pred_check
          %p669 = pneg %p99
        $region94: #{tpu_custom_call.1} parent=87 // pred_check_branch
          %671 = sbr.rel (%p669) target = $region96
        $region95: #{tpu_custom_call.1} parent=87 // pred_region
          %673 = dma.done %s666, 16
        $region96: #{tpu_custom_call.1} parent=87 // pred_fallthru
          _
        %s674 = sand.u32 %s40, 1
        %s675 = scalar_lea.sflag [#allocation13], %s674
        %s676 = sand.u32 %s140, 1
        %s677 = smul.addr %s676, 16
        %s678 = scalar_lea.vmem [#allocation14], %s677
        // Predicated region
        $region97: #{tpu_custom_call.1} parent=87 // pred_check
          %p679 = pneg %p153
        $region98: #{tpu_custom_call.1} parent=87 // pred_check_branch
          %681 = sbr.rel (%p679) target = $region100
        $region99: #{tpu_custom_call.1} parent=87 // pred_region
          %683 = dma.done %s675, 256
        $region100: #{tpu_custom_call.1} parent=87 // pred_fallthru
          _
        // Predicated region
        $region101: #{tpu_custom_call.1} parent=87 // pred_check
          %p684 = pneg %p195
        $region102: #{tpu_custom_call.1} parent=87 // pred_check_branch
          %686 = sbr.rel (%p684) target = $region104
        $region103: #{tpu_custom_call.1} parent=87 // pred_region
          %688 = dma.done [#allocation16], 512
        $region104: #{tpu_custom_call.1} parent=87 // pred_fallthru
          _
        // Predicated region
        $region105: #{tpu_custom_call.1} parent=87 // pred_check
          %p689 = pneg %p237
        $region106: #{tpu_custom_call.1} parent=87 // pred_check_branch
          %691 = sbr.rel (%p689) target = $region108
        $region107: #{tpu_custom_call.1} parent=87 // pred_region
          %693 = dma.done [#allocation16], 2048
        $region108: #{tpu_custom_call.1} parent=87 // pred_fallthru
          _
        // Predicated region
        $region109: #{tpu_custom_call.1} parent=87 // pred_check
          %p694 = pneg %p305
        $region110: #{tpu_custom_call.1} parent=87 // pred_check_branch
          %696 = sbr.rel (%p694) target = $region112
        $region111: #{tpu_custom_call.1} parent=87 // pred_region
          %698 = dma.done [#allocation19], 512
        $region112: #{tpu_custom_call.1} parent=87 // pred_fallthru
          _
        // Predicated region
        $region113: #{tpu_custom_call.1} parent=87 // pred_check
          %p699 = pneg %p368
        $region114: #{tpu_custom_call.1} parent=87 // pred_check_branch
          %701 = sbr.rel (%p699) target = $region116
        $region115: #{tpu_custom_call.1} parent=87 // pred_region
          %703 = dma.done [#allocation19], 512
        $region116: #{tpu_custom_call.1} parent=87 // pred_fallthru
          _
        // Predicated region
        $region117: #{tpu_custom_call.1} parent=87 // pred_check
          %p704 = pneg %p410
        $region118: #{tpu_custom_call.1} parent=87 // pred_check_branch
          %706 = sbr.rel (%p704) target = $region120
        $region119: #{tpu_custom_call.1} parent=87 // pred_region
          %708 = dma.done [#allocation22], 2048
        $region120: #{tpu_custom_call.1} parent=87 // pred_fallthru
          _
        %s709 = sand.u32 %s60, 1
        %s710 = scalar_lea.sflag [#allocation10], %s709
        %s711 = sand.u32 %s60, 1
        %s712 = smul.addr %s711, 16
        %s713 = scalar_lea.vmem [#allocation9], %s712
        %p714 = pneg %p73
        %p715 = pneg %p70
        %s716 = sand.u32 %s40, 1
        %s717 = scalar_lea.sflag [#allocation13], %s716
        %s718 = sand.u32 %s86, 1
        %s719 = scalar_lea.vmem [#allocation12], %s718
        %p720 = pneg %p99
        %p721 = pneg %p96
        %p722 = scmp.lt.s32.totalorder %s44, 1
        %s723 = scalar_select %p722, %s44, 1
        %p724 = scmp.lt.s32.totalorder %s45, 3
        %s725 = scalar_select %p724, %s45, 3
        %s726 = smul.addr %s725, 2
        %s727 = smul.addr %s723, 8
        %s728 = sadd.s32 %s726, %s727
        %s729 = smul.addr %s728, 8
        %s730 = scalar_lea.vmem %s2, %s729
        %p731 = pneg %p127
        %p732 = pneg %p124
        %s733 = sand.u32 %s40, 1
        %s734 = scalar_lea.sflag [#allocation13], %s733
        %s735 = sand.u32 %s140, 1
        %s736 = smul.addr %s735, 16
        %s737 = scalar_lea.vmem [#allocation14], %s736
        %p738 = pneg %p153
        %p739 = pneg %p150
        %p740 = pneg %p174
        %p741 = pneg %p171
        %p742 = pneg %p195
        %p743 = pneg %p192
        %p744 = pneg %p216
        %p745 = pneg %p213
        %p746 = pneg %p237
        %p747 = pneg %p234
        %p748 = pneg %p258
        %p749 = pneg %p255
        %p750 = scmp.lt.s32.totalorder %s45, 3
        %s751 = scalar_select %p750, %s45, 3
        %s752 = smul.addr %s751, 2
        %s753 = smul.addr %s752, 8
        %s754 = scalar_lea.vmem %s9, %s753
        %p755 = pneg %p284
        %p756 = pneg %p281
        %p757 = pneg %p305
        %p758 = pneg %p302
        %p759 = pneg %p326
        %p760 = pneg %p323
        %p761 = pneg %p347
        %p762 = pneg %p344
        %p763 = pneg %p368
        %p764 = pneg %p365
        %p765 = pneg %p389
        %p766 = pneg %p386
        %p767 = pneg %p410
        %p768 = pneg %p407
        %p769 = pneg %p431
        %p770 = pneg %p428
        %p771 = pneg %p457
        %p772 = pneg %p454
        %s773 = sand.u32 %s444, 1
        %s774 = scalar_lea.sflag [#allocation11], %s773
        %s775 = sand.u32 %s444, 1
        %s776 = smul.addr %s775, 16
        %s777 = scalar_lea.vmem [#allocation23], %s776
        %p778 = scmp.lt.s32.totalorder %s44, 1
        %s779 = scalar_select %p778, %s44, 1
        %p780 = scmp.lt.s32.totalorder %s45, 3
        %s781 = scalar_select %p780, %s45, 3
        %s782 = smul.addr %s781, 2
        %s783 = smul.addr %s779, 8
        %s784 = sadd.s32 %s782, %s783
        %s785 = smul.addr %s784, 8
        %s786 = scalar_lea.vmem %s2, %s785
        %p787 = scmp.lt.s32.totalorder %s45, 3
        %s788 = scalar_select %p787, %s45, 3
        %s789 = smul.addr %s788, 2
        %s790 = smul.addr %s789, 8
        %s791 = scalar_lea.vmem %s9, %s790
        %p792 = scmp.eq.s32.totalorder %s45, 0
        // Predicated region
        $region121: #{tpu_custom_call.1} parent=87 // pred_check
          %p793 = pneg %p792
        $region122: #{tpu_custom_call.1} parent=87 // pred_check_branch
          %795 = sbr.rel (%p793) target = $region124
        $region123: #{tpu_custom_call.1} parent=87 // pred_region
          %v796 = vld [vmem:[%s659] sm:$0xff]
          %v797 = vld [vmem:[%s659 + $0x8] sm:$0xff]
          %v798 = vld [vmem:[%s678] sm:$0xff]
          %v799 = vld [vmem:[%s678 + $0x8] sm:$0xff]
          %v800 = vld [vmem:[%s668] sm:$0x1]
          %v801 = vsub.f32 %v800, 1.0
          %v802 = vmul.f32 %v801, 1e+09
          %vm803 = vcmask 122880
          %804 = vst.msk [vmem:[#allocation7] sm:$0x1] %vm803, %v802
          %vm805 = vcmask 523264
          %v806 = vsel %vm805, %v796, 0.0
          %807 = vadd.xlane.f32.xlu0 %v806
          %v808 = vpop.xlane.xlu0 %807
          %v809 = vsel %vm805, %v797, 0.0
          %810 = vadd.xlane.f32.xlu0 %v809
          %v811 = vpop.xlane.xlu0 %810
          %v812 = vrcp.pop 64.0
          %v813 = vmul.f32 64.0, %v812
          %v814 = vsub.f32 1.0, %v813
          %v815 = vmul.f32 %v812, %v814
          %v816 = vadd.f32 %v812, %v815
          %vm817 = vweird.f32 %v812
          %v818 = vsel %vm817, %v812, %v816
          %v819 = vmul.f32 %v808, %v818
          %v820 = vmul.f32 %v811, %v818
          %v821 = vsub.f32 %v796, %v819
          %v822 = vsub.f32 %v797, %v820
          %v823 = vmul.f32 %v821, %v821
          %v824 = vmul.f32 %v822, %v822
          %v825 = vsel %vm805, %v823, 0.0
          %826 = vadd.xlane.f32.xlu0 %v825
          %v827 = vpop.xlane.xlu0 %826
          %v828 = vsel %vm805, %v824, 0.0
          %829 = vadd.xlane.f32.xlu0 %v828
          %v830 = vpop.xlane.xlu0 %829
          %v831 = vmul.f32 %v827, %v818
          %v832 = vmul.f32 %v830, %v818
          %v833 = vadd.f32 %v831, 1e-05
          %v834 = vadd.f32 %v832, 1e-05
          %v835 = vrsqrt.pop %v833
          %v836 = vmul.f32 %v835, %v833
          %v837 = vmul.f32 %v836, %v835
          %v838 = vmul.f32 0.5, %v837
          %v839 = vsub.f32 1.5, %v838
          %v840 = vmul.f32 %v835, %v839
          %vm841 = vweird.f32 %v833
          %vm842 = vweird.f32 %v835
          %vm843 = vmor %vm841, %vm842
          %v844 = vsel %vm843, %v835, %v840
          %v845 = vrsqrt.pop %v834
          %v846 = vmul.f32 %v845, %v834
          %v847 = vmul.f32 %v846, %v845
          %v848 = vmul.f32 0.5, %v847
          %v849 = vsub.f32 1.5, %v848
          %v850 = vmul.f32 %v845, %v849
          %vm851 = vweird.f32 %v834
          %vm852 = vweird.f32 %v845
          %vm853 = vmor %vm851, %vm852
          %v854 = vsel %vm853, %v845, %v850
          %v855 = vmul.f32 %v821, %v844
          %v856 = vmul.f32 %v822, %v854
          %vm857 = vcmask 261120
          %v858 = vsel %vm857, %v798, 0.0
          %859 = vadd.xlane.f32.xlu0 %v858
          %v860 = vpop.xlane.xlu0 %859
          %v861 = vsel %vm857, %v799, 0.0
          %862 = vadd.xlane.f32.xlu0 %v861
          %v863 = vpop.xlane.xlu0 %862
          %v864 = vrcp.pop 32.0
          %v865 = vmul.f32 32.0, %v864
          %v866 = vsub.f32 1.0, %v865
          %v867 = vmul.f32 %v864, %v866
          %v868 = vadd.f32 %v864, %v867
          %vm869 = vweird.f32 %v864
          %v870 = vsel %vm869, %v864, %v868
          %v871 = vmul.f32 %v860, %v870
          %v872 = vmul.f32 %v863, %v870
          %v873 = vsub.f32 %v798, %v871
          %v874 = vsub.f32 %v799, %v872
          %v875 = vmul.f32 %v873, %v873
          %v876 = vmul.f32 %v874, %v874
          %v877 = vsel %vm857, %v875, 0.0
          %878 = vadd.xlane.f32.xlu0 %v877
          %v879 = vpop.xlane.xlu0 %878
          %v880 = vsel %vm857, %v876, 0.0
          %881 = vadd.xlane.f32.xlu0 %v880
          %v882 = vpop.xlane.xlu0 %881
          %v883 = vmul.f32 %v879, %v870
          %v884 = vmul.f32 %v882, %v870
          %v885 = vadd.f32 %v883, 1e-05
          %v886 = vadd.f32 %v884, 1e-05
          %v887 = vrsqrt.pop %v885
          %v888 = vmul.f32 %v887, %v885
          %v889 = vmul.f32 %v888, %v887
          %v890 = vmul.f32 0.5, %v889
          %v891 = vsub.f32 1.5, %v890
          %v892 = vmul.f32 %v887, %v891
          %vm893 = vweird.f32 %v885
          %vm894 = vweird.f32 %v887
          %vm895 = vmor %vm893, %vm894
          %v896 = vsel %vm895, %v887, %v892
          %v897 = vrsqrt.pop %v886
          %v898 = vmul.f32 %v897, %v886
          %v899 = vmul.f32 %v898, %v897
          %v900 = vmul.f32 0.5, %v899
          %v901 = vsub.f32 1.5, %v900
          %v902 = vmul.f32 %v897, %v901
          %vm903 = vweird.f32 %v886
          %vm904 = vweird.f32 %v897
          %vm905 = vmor %vm903, %vm904
          %v906 = vsel %vm905, %v897, %v902
          %v907 = vmul.f32 %v873, %v896
          %v908 = vmul.f32 %v874, %v906
          %909 = vst.msk [vmem:[#allocation6] sm:$0xff] %vm857, %v907
          %910 = vst.msk [vmem:[#allocation6 + $0x8] sm:$0xff] %vm857, %v908
          %v911 = vld [vmem:[%s4] sm:$0x1]
          %v913 = vperm.slane %v911, 0
          %v915 = vmul.f32 %v907, %v913
          %v916 = vmul.f32 %v908, %v913
          %v917 = vld [vmem:[#allocation15] sm:$0xff]
          %v918 = vld [vmem:[#allocation15 + $0x8] sm:$0xff]
          %v919 = vld [vmem:[#allocation15 + $0x10] sm:$0xff]
          %v920 = vld [vmem:[#allocation15 + $0x18] sm:$0xff]
          %v921 = vld [vmem:[%s6] sm:$0x1]
          %v923 = vperm.slane %v921, 0
          %v926 = vsel %vm857, %v915, 0
          %v929 = vsel %vm857, %v916, 0
          %931 = vmatpush.msra.mxu0 0.0
          %932 = vmatpush.msra.mxu0 0.0
          %933 = vmatpush.msra.mxu0 0.0
          %934 = vmatpush.msra.mxu0 0.0
          %935 = vmatpush.msra.mxu0 0.0
          %936 = vmatpush.msra.mxu0 0.0
          %937 = vmatpush.msra.mxu0 0.0
          %938 = vmatpush.msra.mxu0 0.0
          %939 = vmatpush.msra.mxu0 0.0
          %940 = vmatpush.msra.mxu0 0.0
          %941 = vmatpush.msra.mxu0 0.0
          %942 = vmatpush.msra.mxu0 0.0
          %943 = vmatpush.msra.mxu0 %v920
          %944 = vmatpush.msra.mxu0 %v919
          %945 = vmatpush.msra.mxu0 %v918
          %946 = vmatpush.msra.mxu0 %v917
          %947 = vmatmul.f32.gmra.mxu0 %v926
          %v948 = vpop.f32.mrf.mxu0
          %v949 = vadd.f32 %v923, %v948
          %950 = vmatmul.f32.gmra.mxu0 %v929
          %v951 = vpop.f32.mrf.mxu0
          %v952 = vadd.f32 %v923, %v951
          %953 = vdwg.mxu0
          %v954 = vxor.u32 %v949, 2147483648
          %v955 = vxor.u32 %v952, 2147483648
          %v956 = vmul.f32 %v954, 1.442695
          %v957 = vpow.pop %v956
          %v958 = vmul.f32 %v955, 1.442695
          %v959 = vpow.pop %v958
          %v960 = vadd.f32 %v957, 1.0
          %v961 = vadd.f32 %v959, 1.0
          %v962 = vrcp.pop %v960
          %v963 = vmul.f32 %v960, %v962
          %v964 = vsub.f32 1.0, %v963
          %v965 = vmul.f32 %v962, %v964
          %v966 = vadd.f32 %v962, %v965
          %vm967 = vweird.f32 %v960
          %vm968 = vweird.f32 %v962
          %vm969 = vmor %vm967, %vm968
          %v970 = vsel %vm969, %v962, %v966
          %v971 = vand.u32 2147483647, %v960
          %vm972 = vcmp.eq.f32.partialorder %v971, 8.507059e+37
          %v973 = vand.u32 %v960, 2147483648
          %v974 = vor.u32 1.1754944e-38, %v973
          %v975 = vsel %vm972, %v974, %v970
          %v976 = vmul.f32 1.0, %v975
          %v977 = vrcp.pop %v961
          %v978 = vmul.f32 %v961, %v977
          %v979 = vsub.f32 1.0, %v978
          %v980 = vmul.f32 %v977, %v979
          %v981 = vadd.f32 %v977, %v980
          %vm982 = vweird.f32 %v961
          %vm983 = vweird.f32 %v977
          %vm984 = vmor %vm982, %vm983
          %v985 = vsel %vm984, %v977, %v981
          %v986 = vand.u32 2147483647, %v961
          %vm987 = vcmp.eq.f32.partialorder %v986, 8.507059e+37
          %v988 = vand.u32 %v961, 2147483648
          %v989 = vor.u32 1.1754944e-38, %v988
          %v990 = vsel %vm987, %v989, %v985
          %v991 = vmul.f32 1.0, %v990
          %v992 = vmul.f32 %v976, %v855
          %v993 = vmul.f32 %v991, %v856
          %996 = vrot.lane.b32.xlu0 %v949, 64
          %v997 = vpop.permute.xlu0 %996
          %998 = vrot.lane.b32.xlu0 %v952, 64
          %v999 = vpop.permute.xlu0 %998
          %v1002 = vadd.f32 %v992, %v997
          %v1003 = vadd.f32 %v993, %v999
          %v1004 = vld [vmem:[#allocation17] sm:$0xff]
          %v1005 = vld [vmem:[#allocation17 + $0x8] sm:$0xff]
          %v1006 = vld [vmem:[#allocation17 + $0x10] sm:$0xff]
          %v1007 = vld [vmem:[#allocation17 + $0x18] sm:$0xff]
          %v1008 = vld [vmem:[#allocation17 + $0x20] sm:$0xff]
          %v1009 = vld [vmem:[#allocation17 + $0x28] sm:$0xff]
          %v1010 = vld [vmem:[#allocation17 + $0x30] sm:$0xff]
          %v1011 = vld [vmem:[#allocation17 + $0x38] sm:$0xff]
          %v1012 = vld [vmem:[#allocation17 + $0x40] sm:$0xff]
          %v1013 = vld [vmem:[#allocation17 + $0x48] sm:$0xff]
          %v1014 = vld [vmem:[#allocation17 + $0x50] sm:$0xff]
          %v1015 = vld [vmem:[#allocation17 + $0x58] sm:$0xff]
          %v1016 = vld [vmem:[#allocation17 + $0x60] sm:$0xff]
          %v1017 = vld [vmem:[#allocation17 + $0x68] sm:$0xff]
          %v1018 = vld [vmem:[#allocation17 + $0x70] sm:$0xff]
          %v1019 = vld [vmem:[#allocation17 + $0x78] sm:$0xff]
          %v1021 = vsel %vm805, %v1002, 0
          %v1024 = vsel %vm805, %v1003, 0
          %1026 = vmatpush.msra.mxu0 0.0
          %1027 = vmatpush.msra.mxu0 0.0
          %1028 = vmatpush.msra.mxu0 0.0
          %1029 = vmatpush.msra.mxu0 0.0
          %1030 = vmatpush.msra.mxu0 0.0
          %1031 = vmatpush.msra.mxu0 0.0
          %1032 = vmatpush.msra.mxu0 0.0
          %1033 = vmatpush.msra.mxu0 0.0
          %1034 = vmatpush.msra.mxu0 %v1018
          %1035 = vmatpush.msra.mxu0 %v1016
          %1036 = vmatpush.msra.mxu0 %v1014
          %1037 = vmatpush.msra.mxu0 %v1012
          %1038 = vmatpush.msra.mxu0 %v1010
          %1039 = vmatpush.msra.mxu0 %v1008
          %1040 = vmatpush.msra.mxu0 %v1006
          %1041 = vmatpush.msra.mxu0 %v1004
          %1042 = vmatmul.f32.gmra.mxu0 %v1021
          %v1043 = vpop.f32.mrf.mxu0
          %v1044 = vadd.f32 0.0, %v1043
          %1045 = vmatmul.f32.gmra.mxu0 %v1024
          %v1046 = vpop.f32.mrf.mxu0
          %v1047 = vadd.f32 0.0, %v1046
          %1048 = vdwg.mxu0
          %1049 = vmatpush.msra.mxu0 0.0
          %1050 = vmatpush.msra.mxu0 0.0
          %1051 = vmatpush.msra.mxu0 0.0
          %1052 = vmatpush.msra.mxu0 0.0
          %1053 = vmatpush.msra.mxu0 0.0
          %1054 = vmatpush.msra.mxu0 0.0
          %1055 = vmatpush.msra.mxu0 0.0
          %1056 = vmatpush.msra.mxu0 0.0
          %1057 = vmatpush.msra.mxu0 %v1019
          %1058 = vmatpush.msra.mxu0 %v1017
          %1059 = vmatpush.msra.mxu0 %v1015
          %1060 = vmatpush.msra.mxu0 %v1013
          %1061 = vmatpush.msra.mxu0 %v1011
          %1062 = vmatpush.msra.mxu0 %v1009
          %1063 = vmatpush.msra.mxu0 %v1007
          %1064 = vmatpush.msra.mxu0 %v1005
          %1065 = vmatmul.f32.gmra.mxu0 %v1021
          %v1066 = vpop.f32.mrf.mxu0
          %v1067 = vadd.f32 0.0, %v1066
          %1068 = vmatmul.f32.gmra.mxu0 %v1024
          %v1069 = vpop.f32.mrf.mxu0
          %v1070 = vadd.f32 0.0, %v1069
          %1071 = vdwg.mxu0
          %v1072 = vld [vmem:[%s8] sm:$0x1]
          %v1074 = vperm.slane %v1072, 0
          %v1076 = vadd.f32 %v1044, %v1074
          %v1077 = vadd.f32 %v1047, %v1074
          %v1078 = vxor.u32 %v1067, 2147483648
          %v1079 = vxor.u32 %v1070, 2147483648
          %v1080 = vmul.f32 %v1078, 1.442695
          %v1081 = vpow.pop %v1080
          %v1082 = vmul.f32 %v1079, 1.442695
          %v1083 = vpow.pop %v1082
          %v1084 = vadd.f32 %v1081, 1.0
          %v1085 = vadd.f32 %v1083, 1.0
          %v1086 = vrcp.pop %v1084
          %v1087 = vmul.f32 %v1084, %v1086
          %v1088 = vsub.f32 1.0, %v1087
          %v1089 = vmul.f32 %v1086, %v1088
          %v1090 = vadd.f32 %v1086, %v1089
          %vm1091 = vweird.f32 %v1084
          %vm1092 = vweird.f32 %v1086
          %vm1093 = vmor %vm1091, %vm1092
          %v1094 = vsel %vm1093, %v1086, %v1090
          %v1095 = vand.u32 2147483647, %v1084
          %vm1096 = vcmp.eq.f32.partialorder %v1095, 8.507059e+37
          %v1097 = vand.u32 %v1084, 2147483648
          %v1098 = vor.u32 1.1754944e-38, %v1097
          %v1099 = vsel %vm1096, %v1098, %v1094
          %v1100 = vmul.f32 1.0, %v1099
          %v1101 = vrcp.pop %v1085
          %v1102 = vmul.f32 %v1085, %v1101
          %v1103 = vsub.f32 1.0, %v1102
          %v1104 = vmul.f32 %v1101, %v1103
          %v1105 = vadd.f32 %v1101, %v1104
          %vm1106 = vweird.f32 %v1085
          %vm1107 = vweird.f32 %v1101
          %vm1108 = vmor %vm1106, %vm1107
          %v1109 = vsel %vm1108, %v1101, %v1105
          %v1110 = vand.u32 2147483647, %v1085
          %vm1111 = vcmp.eq.f32.partialorder %v1110, 8.507059e+37
          %v1112 = vand.u32 %v1085, 2147483648
          %v1113 = vor.u32 1.1754944e-38, %v1112
          %v1114 = vsel %vm1111, %v1113, %v1109
          %v1115 = vmul.f32 1.0, %v1114
          %vm1116 = vcmask 130048
          %1117 = vst.msk [vmem:[#allocation2] sm:$0xff] %vm1116, %v1076
          %1118 = vst.msk [vmem:[#allocation2 + $0x8] sm:$0xff] %vm1116, %v1077
          %1121 = vrot.lane.b32.xlu0 %v1044, 64
          %v1122 = vpop.permute.xlu0 %1121
          %1123 = vrot.lane.b32.xlu0 %v1047, 64
          %v1124 = vpop.permute.xlu0 %1123
          %1127 = vst.msk [vmem:[#allocation3] sm:$0xff] %vm1116, %v1122
          %1128 = vst.msk [vmem:[#allocation3 + $0x8] sm:$0xff] %vm1116, %v1124
          %1129 = vst.msk [vmem:[#allocation4] sm:$0xff] %vm1116, %v1067
          %1130 = vst.msk [vmem:[#allocation4 + $0x8] sm:$0xff] %vm1116, %v1070
          %1133 = vrot.lane.b32.xlu0 %v1100, 64
          %v1134 = vpop.permute.xlu0 %1133
          %1135 = vrot.lane.b32.xlu0 %v1115, 64
          %v1136 = vpop.permute.xlu0 %1135
          %1139 = vst.msk [vmem:[#allocation5] sm:$0xff] %vm1116, %v1134
          %1140 = vst.msk [vmem:[#allocation5 + $0x8] sm:$0xff] %vm1116, %v1136
          %1143 = vrot.lane.b32.xlu0 %v1076, 112
          %v1144 = vpop.permute.xlu0 %1143
          %1145 = vrot.lane.b32.xlu0 %v1077, 112
          %v1146 = vpop.permute.xlu0 %1145
          %s1149 = scalar_lea.vmem [#allocation2], 16
          %1150 = vst.msk [vmem:[%s1149] sm:$0xff] %vm1116, %v1144
          %1151 = vst.msk [vmem:[%s1149 + $0x8] sm:$0xff] %vm1116, %v1146
          %1152 = vrot.lane.b32.xlu0 %v1044, 48
          %v1153 = vpop.permute.xlu0 %1152
          %1154 = vrot.lane.b32.xlu0 %v1047, 48
          %v1155 = vpop.permute.xlu0 %1154
          %s1158 = scalar_lea.vmem [#allocation3], 16
          %1159 = vst.msk [vmem:[%s1158] sm:$0xff] %vm1116, %v1153
          %1160 = vst.msk [vmem:[%s1158 + $0x8] sm:$0xff] %vm1116, %v1155
          %1163 = vrot.lane.b32.xlu0 %v1067, 112
          %v1164 = vpop.permute.xlu0 %1163
          %1165 = vrot.lane.b32.xlu0 %v1070, 112
          %v1166 = vpop.permute.xlu0 %1165
          %s1169 = scalar_lea.vmem [#allocation4], 16
          %1170 = vst.msk [vmem:[%s1169] sm:$0xff] %vm1116, %v1164
          %1171 = vst.msk [vmem:[%s1169 + $0x8] sm:$0xff] %vm1116, %v1166
          %1172 = vrot.lane.b32.xlu0 %v1100, 48
          %v1173 = vpop.permute.xlu0 %1172
          %1174 = vrot.lane.b32.xlu0 %v1115, 48
          %v1175 = vpop.permute.xlu0 %1174
          %s1178 = scalar_lea.vmem [#allocation5], 16
          %1179 = vst.msk [vmem:[%s1178] sm:$0xff] %vm1116, %v1173
          %1180 = vst.msk [vmem:[%s1178 + $0x8] sm:$0xff] %vm1116, %v1175
          %1181 = vrot.lane.b32.xlu0 %v1076, 96
          %v1182 = vpop.permute.xlu0 %1181
          %1183 = vrot.lane.b32.xlu0 %v1077, 96
          %v1184 = vpop.permute.xlu0 %1183
          %s1187 = scalar_lea.vmem [#allocation2], 32
          %1188 = vst.msk [vmem:[%s1187] sm:$0xff] %vm1116, %v1182
          %1189 = vst.msk [vmem:[%s1187 + $0x8] sm:$0xff] %vm1116, %v1184
          %1190 = vrot.lane.b32.xlu0 %v1044, 32
          %v1191 = vpop.permute.xlu0 %1190
          %1192 = vrot.lane.b32.xlu0 %v1047, 32
          %v1193 = vpop.permute.xlu0 %1192
          %s1196 = scalar_lea.vmem [#allocation3], 32
          %1197 = vst.msk [vmem:[%s1196] sm:$0xff] %vm1116, %v1191
          %1198 = vst.msk [vmem:[%s1196 + $0x8] sm:$0xff] %vm1116, %v1193
          %1199 = vrot.lane.b32.xlu0 %v1067, 96
          %v1200 = vpop.permute.xlu0 %1199
          %1201 = vrot.lane.b32.xlu0 %v1070, 96
          %v1202 = vpop.permute.xlu0 %1201
          %s1205 = scalar_lea.vmem [#allocation4], 32
          %1206 = vst.msk [vmem:[%s1205] sm:$0xff] %vm1116, %v1200
          %1207 = vst.msk [vmem:[%s1205 + $0x8] sm:$0xff] %vm1116, %v1202
          %1208 = vrot.lane.b32.xlu0 %v1100, 32
          %v1209 = vpop.permute.xlu0 %1208
          %1210 = vrot.lane.b32.xlu0 %v1115, 32
          %v1211 = vpop.permute.xlu0 %1210
          %s1214 = scalar_lea.vmem [#allocation5], 32
          %1215 = vst.msk [vmem:[%s1214] sm:$0xff] %vm1116, %v1209
          %1216 = vst.msk [vmem:[%s1214 + $0x8] sm:$0xff] %vm1116, %v1211
          %1217 = vrot.lane.b32.xlu0 %v1076, 80
          %v1218 = vpop.permute.xlu0 %1217
          %1219 = vrot.lane.b32.xlu0 %v1077, 80
          %v1220 = vpop.permute.xlu0 %1219
          %s1223 = scalar_lea.vmem [#allocation2], 48
          %1224 = vst.msk [vmem:[%s1223] sm:$0xff] %vm1116, %v1218
          %1225 = vst.msk [vmem:[%s1223 + $0x8] sm:$0xff] %vm1116, %v1220
          %1226 = vrot.lane.b32.xlu0 %v1044, 16
          %v1227 = vpop.permute.xlu0 %1226
          %1228 = vrot.lane.b32.xlu0 %v1047, 16
          %v1229 = vpop.permute.xlu0 %1228
          %s1232 = scalar_lea.vmem [#allocation3], 48
          %1233 = vst.msk [vmem:[%s1232] sm:$0xff] %vm1116, %v1227
          %1234 = vst.msk [vmem:[%s1232 + $0x8] sm:$0xff] %vm1116, %v1229
          %1235 = vrot.lane.b32.xlu0 %v1067, 80
          %v1236 = vpop.permute.xlu0 %1235
          %1237 = vrot.lane.b32.xlu0 %v1070, 80
          %v1238 = vpop.permute.xlu0 %1237
          %s1241 = scalar_lea.vmem [#allocation4], 48
          %1242 = vst.msk [vmem:[%s1241] sm:$0xff] %vm1116, %v1236
          %1243 = vst.msk [vmem:[%s1241 + $0x8] sm:$0xff] %vm1116, %v1238
          %1244 = vrot.lane.b32.xlu0 %v1100, 16
          %v1245 = vpop.permute.xlu0 %1244
          %1246 = vrot.lane.b32.xlu0 %v1115, 16
          %v1247 = vpop.permute.xlu0 %1246
          %s1250 = scalar_lea.vmem [#allocation5], 48
          %1251 = vst.msk [vmem:[%s1250] sm:$0xff] %vm1116, %v1245
          %1252 = vst.msk [vmem:[%s1250 + $0x8] sm:$0xff] %vm1116, %v1247
          %1253 = vst.msk [vmem:[#allocation8] sm:$0xff] %vm805, 0.0
          %1254 = vst.msk [vmem:[#allocation8 + $0x8] sm:$0xff] %vm805, 0.0
        $region124: #{tpu_custom_call.1} parent=87 // pred_fallthru
          _
        %s1255 = smul.u32 %s45, 16
        %s1256 = scalar_lea.vmem [#allocation2], %s1255
        %v1257 = vld [vmem:[%s1256] sm:$0xff]
        %v1258 = vld [vmem:[%s1256 + $0x8] sm:$0xff]
        %s1259 = scalar_lea.vmem [#allocation3], %s1255
        %v1260 = vld [vmem:[%s1259] sm:$0xff]
        %v1261 = vld [vmem:[%s1259 + $0x8] sm:$0xff]
        %s1262 = scalar_lea.vmem [#allocation4], %s1255
        %v1263 = vld [vmem:[%s1262] sm:$0xff]
        %v1264 = vld [vmem:[%s1262 + $0x8] sm:$0xff]
        %v1265 = vld [vmem:[#allocation7] sm:$0x1]
        %v1267 = vperm.slane %v1265, 0
        %vm1269 = vcmask 130048
        %v1271 = vsel %vm1269, %v1257, 0
        %v1274 = vsel %vm1269, %v1258, 0
        %v1277 = vsel %vm1269, %v1260, 0
        %v1280 = vsel %vm1269, %v1261, 0
        %1282 = vmatpush.xpose.msra.mxu0 0.0
        %1283 = vmatpush.xpose.msra.mxu0 0.0
        %1284 = vmatpush.xpose.msra.mxu0 0.0
        %1285 = vmatpush.xpose.msra.mxu0 0.0
        %1286 = vmatpush.xpose.msra.mxu0 0.0
        %1287 = vmatpush.xpose.msra.mxu0 0.0
        %1288 = vmatpush.xpose.msra.mxu0 0.0
        %1289 = vmatpush.xpose.msra.mxu0 0.0
        %1290 = vmatpush.xpose.msra.mxu0 0.0
        %1291 = vmatpush.xpose.msra.mxu0 0.0
        %1292 = vmatpush.xpose.msra.mxu0 0.0
        %1293 = vmatpush.xpose.msra.mxu0 0.0
        %1294 = vmatpush.xpose.msra.mxu0 0.0
        %1295 = vmatpush.xpose.msra.mxu0 0.0
        %1296 = vmatpush.xpose.msra.mxu0 %v1280
        %1297 = vmatpush.xpose.msra.mxu0 %v1277
        %1298 = vmatmul.f32.gmra.mxu0 %v1271
        %v1299 = vpop.f32.mrf.mxu0
        %v1300 = vadd.f32 %v1267, %v1299
        %1301 = vmatmul.f32.gmra.mxu0 %v1274
        %v1302 = vpop.f32.mrf.mxu0
        %v1303 = vadd.f32 %v1267, %v1302
        %1304 = vdwg.mxu0
        %v1305 = vld [vmem:[%s786] sm:$0xff]
        %v1306 = vld [vmem:[%s786 + $0x8] sm:$0xff]
        %v1307 = vadd.f32 %v1300, %v1305
        %v1308 = vadd.f32 %v1303, %v1306
        %v1309 = vsel %vm1269, %v1307, -inf
        %1310 = vmax.xlane.f32.xlu0 %v1309
        %v1311 = vpop.xlane.xlu0 %1310
        %v1312 = vsel %vm1269, %v1308, -inf
        %1313 = vmax.xlane.f32.xlu0 %v1312
        %v1314 = vpop.xlane.xlu0 %1313
        %v1315 = vsub.f32 %v1307, %v1311
        %v1316 = vsub.f32 %v1308, %v1314
        %v1317 = vmul.f32 %v1315, 1.442695
        %v1318 = vpow.pop %v1317
        %v1319 = vmul.f32 %v1316, 1.442695
        %v1320 = vpow.pop %v1319
        %v1321 = vsel %vm1269, %v1318, 0.0
        %1322 = vadd.xlane.f32.xlu0 %v1321
        %v1323 = vpop.xlane.xlu0 %1322
        %v1324 = vsel %vm1269, %v1320, 0.0
        %1325 = vadd.xlane.f32.xlu0 %v1324
        %v1326 = vpop.xlane.xlu0 %1325
        %v1327 = vrcp.pop %v1323
        %v1328 = vrcp.pop %v1326
        %v1329 = vmul.f32 %v1318, %v1327
        %v1330 = vmul.f32 %v1320, %v1328
        %v1332 = vsel %vm1269, %v1329, 0
        %v1335 = vsel %vm1269, %v1330, 0
        %1337 = vmatpush.msra.mxu0 0.0
        %1338 = vmatpush.msra.mxu0 0.0
        %1339 = vmatpush.msra.mxu0 0.0
        %1340 = vmatpush.msra.mxu0 0.0
        %1341 = vmatpush.msra.mxu0 0.0
        %1342 = vmatpush.msra.mxu0 0.0
        %1343 = vmatpush.msra.mxu0 0.0
        %1344 = vmatpush.msra.mxu0 0.0
        %1345 = vmatpush.msra.mxu0 0.0
        %1346 = vmatpush.msra.mxu0 0.0
        %1347 = vmatpush.msra.mxu0 0.0
        %1348 = vmatpush.msra.mxu0 0.0
        %1349 = vmatpush.msra.mxu0 0.0
        %1350 = vmatpush.msra.mxu0 0.0
        %1351 = vmatpush.msra.mxu0 %v1264
        %1352 = vmatpush.msra.mxu0 %v1263
        %1353 = vmatmul.f32.gmra.mxu0 %v1332
        %v1354 = vpop.f32.mrf.mxu0
        %v1355 = vadd.f32 0.0, %v1354
        %1356 = vmatmul.f32.gmra.mxu0 %v1335
        %v1357 = vpop.f32.mrf.mxu0
        %v1358 = vadd.f32 0.0, %v1357
        %1359 = vdwg.mxu0
        %s1360 = scalar_lea.vmem [#allocation5], %s1255
        %v1361 = vld [vmem:[%s1360] sm:$0xff]
        %v1362 = vld [vmem:[%s1360 + $0x8] sm:$0xff]
        %v1363 = vmul.f32 %v1355, %v1361
        %v1364 = vmul.f32 %v1358, %v1362
        %v1365 = vld [vmem:[#allocation8] sm:$0xff]
        %v1366 = vld [vmem:[#allocation8 + $0x8] sm:$0xff]
        %v1367 = vld [vmem:[%s791] sm:$0xff]
        %v1368 = vld [vmem:[%s791 + $0x8] sm:$0xff]
        %v1370 = vsel %vm1269, %v1363, 0
        %v1373 = vsel %vm1269, %v1364, 0
        %1375 = vmatpush.msra.mxu0 0.0
        %1376 = vmatpush.msra.mxu0 0.0
        %1377 = vmatpush.msra.mxu0 0.0
        %1378 = vmatpush.msra.mxu0 0.0
        %1379 = vmatpush.msra.mxu0 0.0
        %1380 = vmatpush.msra.mxu0 0.0
        %1381 = vmatpush.msra.mxu0 0.0
        %1382 = vmatpush.msra.mxu0 0.0
        %1383 = vmatpush.msra.mxu0 0.0
        %1384 = vmatpush.msra.mxu0 0.0
        %1385 = vmatpush.msra.mxu0 0.0
        %1386 = vmatpush.msra.mxu0 0.0
        %1387 = vmatpush.msra.mxu0 0.0
        %1388 = vmatpush.msra.mxu0 0.0
        %1389 = vmatpush.msra.mxu0 %v1368
        %1390 = vmatpush.msra.mxu0 %v1367
        %1391 = vmatmul.f32.gmra.mxu0 %v1370
        %v1392 = vpop.f32.mrf.mxu0
        %v1393 = vadd.f32 0.0, %v1392
        %1394 = vmatmul.f32.gmra.mxu0 %v1373
        %v1395 = vpop.f32.mrf.mxu0
        %v1396 = vadd.f32 0.0, %v1395
        %1397 = vdwg.mxu0
        %v1398 = vadd.f32 %v1365, %v1393
        %v1399 = vadd.f32 %v1366, %v1396
        %vm1400 = vcmask 523264
        %1401 = vst.msk [vmem:[#allocation8] sm:$0xff] %vm1400, %v1398
        %1402 = vst.msk [vmem:[#allocation8 + $0x8] sm:$0xff] %vm1400, %v1399
        %p1403 = scmp.eq.s32.totalorder %s45, 3
        // Predicated region
        $region125: #{tpu_custom_call.1} parent=87 // pred_check
          %p1404 = pneg %p1403
        $region126: #{tpu_custom_call.1} parent=87 // pred_check_branch
          %1406 = sbr.rel (%p1404) target = $region128
        $region127: #{tpu_custom_call.1} parent=87 // pred_region
          %v1407 = vld [vmem:[%s659] sm:$0xff]
          %v1408 = vld [vmem:[%s659 + $0x8] sm:$0xff]
          %v1409 = vld [vmem:[%s678] sm:$0xff]
          %v1410 = vld [vmem:[%s678 + $0x8] sm:$0xff]
          %v1411 = vld [vmem:[#allocation18] sm:$0xff]
          %v1412 = vld [vmem:[#allocation18 + $0x8] sm:$0xff]
          %v1413 = vld [vmem:[#allocation18 + $0x10] sm:$0xff]
          %v1414 = vld [vmem:[#allocation18 + $0x18] sm:$0xff]
          %v1415 = vld [vmem:[%s11] sm:$0x1]
          %v1417 = vperm.slane %v1415, 0
          %vm1419 = vcmask 261120
          %v1421 = vsel %vm1419, %v1409, 0
          %v1424 = vsel %vm1419, %v1410, 0
          %1426 = vmatpush.msra.mxu0 0.0
          %1427 = vmatpush.msra.mxu0 0.0
          %1428 = vmatpush.msra.mxu0 0.0
          %1429 = vmatpush.msra.mxu0 0.0
          %1430 = vmatpush.msra.mxu0 0.0
          %1431 = vmatpush.msra.mxu0 0.0
          %1432 = vmatpush.msra.mxu0 0.0
          %1433 = vmatpush.msra.mxu0 0.0
          %1434 = vmatpush.msra.mxu0 0.0
          %1435 = vmatpush.msra.mxu0 0.0
          %1436 = vmatpush.msra.mxu0 0.0
          %1437 = vmatpush.msra.mxu0 0.0
          %1438 = vmatpush.msra.mxu0 %v1414
          %1439 = vmatpush.msra.mxu0 %v1413
          %1440 = vmatpush.msra.mxu0 %v1412
          %1441 = vmatpush.msra.mxu0 %v1411
          %1442 = vmatmul.f32.gmra.mxu0 %v1421
          %v1443 = vpop.f32.mrf.mxu0
          %v1444 = vadd.f32 %v1417, %v1443
          %1445 = vmatmul.f32.gmra.mxu0 %v1424
          %v1446 = vpop.f32.mrf.mxu0
          %v1447 = vadd.f32 %v1417, %v1446
          %1448 = vdwg.mxu0
          %v1449 = vxor.u32 %v1444, 2147483648
          %v1450 = vxor.u32 %v1447, 2147483648
          %v1451 = vmul.f32 %v1449, 1.442695
          %v1452 = vpow.pop %v1451
          %v1453 = vmul.f32 %v1450, 1.442695
          %v1454 = vpow.pop %v1453
          %v1455 = vadd.f32 %v1452, 1.0
          %v1456 = vadd.f32 %v1454, 1.0
          %v1457 = vrcp.pop %v1455
          %v1458 = vmul.f32 %v1455, %v1457
          %v1459 = vsub.f32 1.0, %v1458
          %v1460 = vmul.f32 %v1457, %v1459
          %v1461 = vadd.f32 %v1457, %v1460
          %vm1462 = vweird.f32 %v1455
          %vm1463 = vweird.f32 %v1457
          %vm1464 = vmor %vm1462, %vm1463
          %v1465 = vsel %vm1464, %v1457, %v1461
          %v1466 = vand.u32 2147483647, %v1455
          %vm1467 = vcmp.eq.f32.partialorder %v1466, 8.507059e+37
          %v1468 = vand.u32 %v1455, 2147483648
          %v1469 = vor.u32 1.1754944e-38, %v1468
          %v1470 = vsel %vm1467, %v1469, %v1465
          %v1471 = vmul.f32 1.0, %v1470
          %v1472 = vrcp.pop %v1456
          %v1473 = vmul.f32 %v1456, %v1472
          %v1474 = vsub.f32 1.0, %v1473
          %v1475 = vmul.f32 %v1472, %v1474
          %v1476 = vadd.f32 %v1472, %v1475
          %vm1477 = vweird.f32 %v1456
          %vm1478 = vweird.f32 %v1472
          %vm1479 = vmor %vm1477, %vm1478
          %v1480 = vsel %vm1479, %v1472, %v1476
          %v1481 = vand.u32 2147483647, %v1456
          %vm1482 = vcmp.eq.f32.partialorder %v1481, 8.507059e+37
          %v1483 = vand.u32 %v1456, 2147483648
          %v1484 = vor.u32 1.1754944e-38, %v1483
          %v1485 = vsel %vm1482, %v1484, %v1480
          %v1486 = vmul.f32 1.0, %v1485
          %v1487 = vld [vmem:[#allocation8] sm:$0xff]
          %v1488 = vld [vmem:[#allocation8 + $0x8] sm:$0xff]
          %v1489 = vmul.f32 %v1471, %v1487
          %v1490 = vmul.f32 %v1486, %v1488
          %v1491 = vadd.f32 %v1407, %v1489
          %v1492 = vadd.f32 %v1408, %v1490
          %v1493 = vsel %vm1400, %v1491, 0.0
          %1494 = vadd.xlane.f32.xlu0 %v1493
          %v1495 = vpop.xlane.xlu0 %1494
          %v1496 = vsel %vm1400, %v1492, 0.0
          %1497 = vadd.xlane.f32.xlu0 %v1496
          %v1498 = vpop.xlane.xlu0 %1497
          %v1499 = vrcp.pop 64.0
          %v1500 = vmul.f32 64.0, %v1499
          %v1501 = vsub.f32 1.0, %v1500
          %v1502 = vmul.f32 %v1499, %v1501
          %v1503 = vadd.f32 %v1499, %v1502
          %vm1504 = vweird.f32 %v1499
          %v1505 = vsel %vm1504, %v1499, %v1503
          %v1506 = vmul.f32 %v1495, %v1505
          %v1507 = vmul.f32 %v1498, %v1505
          %v1508 = vsub.f32 %v1491, %v1506
          %v1509 = vsub.f32 %v1492, %v1507
          %v1510 = vmul.f32 %v1508, %v1508
          %v1511 = vmul.f32 %v1509, %v1509
          %v1512 = vsel %vm1400, %v1510, 0.0
          %1513 = vadd.xlane.f32.xlu0 %v1512
          %v1514 = vpop.xlane.xlu0 %1513
          %v1515 = vsel %vm1400, %v1511, 0.0
          %1516 = vadd.xlane.f32.xlu0 %v1515
          %v1517 = vpop.xlane.xlu0 %1516
          %v1518 = vmul.f32 %v1514, %v1505
          %v1519 = vmul.f32 %v1517, %v1505
          %v1520 = vadd.f32 %v1518, 1e-05
          %v1521 = vadd.f32 %v1519, 1e-05
          %v1522 = vrsqrt.pop %v1520
          %v1523 = vmul.f32 %v1522, %v1520
          %v1524 = vmul.f32 %v1523, %v1522
          %v1525 = vmul.f32 0.5, %v1524
          %v1526 = vsub.f32 1.5, %v1525
          %v1527 = vmul.f32 %v1522, %v1526
          %vm1528 = vweird.f32 %v1520
          %vm1529 = vweird.f32 %v1522
          %vm1530 = vmor %vm1528, %vm1529
          %v1531 = vsel %vm1530, %v1522, %v1527
          %v1532 = vrsqrt.pop %v1521
          %v1533 = vmul.f32 %v1532, %v1521
          %v1534 = vmul.f32 %v1533, %v1532
          %v1535 = vmul.f32 0.5, %v1534
          %v1536 = vsub.f32 1.5, %v1535
          %v1537 = vmul.f32 %v1532, %v1536
          %vm1538 = vweird.f32 %v1521
          %vm1539 = vweird.f32 %v1532
          %vm1540 = vmor %vm1538, %vm1539
          %v1541 = vsel %vm1540, %v1532, %v1537
          %v1542 = vmul.f32 %v1508, %v1531
          %v1543 = vmul.f32 %v1509, %v1541
          %v1544 = vld [vmem:[#allocation6] sm:$0xff]
          %v1545 = vld [vmem:[#allocation6 + $0x8] sm:$0xff]
          %v1546 = vld [vmem:[%s12] sm:$0x1]
          %v1548 = vperm.slane %v1546, 0
          %v1550 = vmul.f32 %v1544, %v1548
          %v1551 = vmul.f32 %v1545, %v1548
          %v1552 = vld [vmem:[#allocation20] sm:$0xff]
          %v1553 = vld [vmem:[#allocation20 + $0x8] sm:$0xff]
          %v1554 = vld [vmem:[#allocation20 + $0x10] sm:$0xff]
          %v1555 = vld [vmem:[#allocation20 + $0x18] sm:$0xff]
          %v1556 = vld [vmem:[%s14] sm:$0x1]
          %v1558 = vperm.slane %v1556, 0
          %v1561 = vsel %vm1419, %v1550, 0
          %v1564 = vsel %vm1419, %v1551, 0
          %1566 = vmatpush.msra.mxu0 0.0
          %1567 = vmatpush.msra.mxu0 0.0
          %1568 = vmatpush.msra.mxu0 0.0
          %1569 = vmatpush.msra.mxu0 0.0
          %1570 = vmatpush.msra.mxu0 0.0
          %1571 = vmatpush.msra.mxu0 0.0
          %1572 = vmatpush.msra.mxu0 0.0
          %1573 = vmatpush.msra.mxu0 0.0
          %1574 = vmatpush.msra.mxu0 0.0
          %1575 = vmatpush.msra.mxu0 0.0
          %1576 = vmatpush.msra.mxu0 0.0
          %1577 = vmatpush.msra.mxu0 0.0
          %1578 = vmatpush.msra.mxu0 %v1555
          %1579 = vmatpush.msra.mxu0 %v1554
          %1580 = vmatpush.msra.mxu0 %v1553
          %1581 = vmatpush.msra.mxu0 %v1552
          %1582 = vmatmul.f32.gmra.mxu0 %v1561
          %v1583 = vpop.f32.mrf.mxu0
          %v1584 = vadd.f32 %v1558, %v1583
          %1585 = vmatmul.f32.gmra.mxu0 %v1564
          %v1586 = vpop.f32.mrf.mxu0
          %v1587 = vadd.f32 %v1558, %v1586
          %1588 = vdwg.mxu0
          %v1589 = vxor.u32 %v1584, 2147483648
          %v1590 = vxor.u32 %v1587, 2147483648
          %v1591 = vmul.f32 %v1589, 1.442695
          %v1592 = vpow.pop %v1591
          %v1593 = vmul.f32 %v1590, 1.442695
          %v1594 = vpow.pop %v1593
          %v1595 = vadd.f32 %v1592, 1.0
          %v1596 = vadd.f32 %v1594, 1.0
          %v1597 = vrcp.pop %v1595
          %v1598 = vmul.f32 %v1595, %v1597
          %v1599 = vsub.f32 1.0, %v1598
          %v1600 = vmul.f32 %v1597, %v1599
          %v1601 = vadd.f32 %v1597, %v1600
          %vm1602 = vweird.f32 %v1595
          %vm1603 = vweird.f32 %v1597
          %vm1604 = vmor %vm1602, %vm1603
          %v1605 = vsel %vm1604, %v1597, %v1601
          %v1606 = vand.u32 2147483647, %v1595
          %vm1607 = vcmp.eq.f32.partialorder %v1606, 8.507059e+37
          %v1608 = vand.u32 %v1595, 2147483648
          %v1609 = vor.u32 1.1754944e-38, %v1608
          %v1610 = vsel %vm1607, %v1609, %v1605
          %v1611 = vmul.f32 1.0, %v1610
          %v1612 = vrcp.pop %v1596
          %v1613 = vmul.f32 %v1596, %v1612
          %v1614 = vsub.f32 1.0, %v1613
          %v1615 = vmul.f32 %v1612, %v1614
          %v1616 = vadd.f32 %v1612, %v1615
          %vm1617 = vweird.f32 %v1596
          %vm1618 = vweird.f32 %v1612
          %vm1619 = vmor %vm1617, %vm1618
          %v1620 = vsel %vm1619, %v1612, %v1616
          %v1621 = vand.u32 2147483647, %v1596
          %vm1622 = vcmp.eq.f32.partialorder %v1621, 8.507059e+37
          %v1623 = vand.u32 %v1596, 2147483648
          %v1624 = vor.u32 1.1754944e-38, %v1623
          %v1625 = vsel %vm1622, %v1624, %v1620
          %v1626 = vmul.f32 1.0, %v1625
          %v1627 = vmul.f32 %v1611, %v1542
          %v1628 = vmul.f32 %v1626, %v1543
          %1631 = vrot.lane.b32.xlu0 %v1584, 64
          %v1632 = vpop.permute.xlu0 %1631
          %1633 = vrot.lane.b32.xlu0 %v1587, 64
          %v1634 = vpop.permute.xlu0 %1633
          %v1637 = vadd.f32 %v1627, %v1632
          %v1638 = vadd.f32 %v1628, %v1634
          %v1639 = vld [vmem:[#allocation21] sm:$0xff]
          %v1640 = vld [vmem:[#allocation21 + $0x8] sm:$0xff]
          %v1641 = vld [vmem:[#allocation21 + $0x10] sm:$0xff]
          %v1642 = vld [vmem:[#allocation21 + $0x18] sm:$0xff]
          %v1643 = vld [vmem:[#allocation21 + $0x20] sm:$0xff]
          %v1644 = vld [vmem:[#allocation21 + $0x28] sm:$0xff]
          %v1645 = vld [vmem:[#allocation21 + $0x30] sm:$0xff]
          %v1646 = vld [vmem:[#allocation21 + $0x38] sm:$0xff]
          %v1647 = vld [vmem:[#allocation21 + $0x40] sm:$0xff]
          %v1648 = vld [vmem:[#allocation21 + $0x48] sm:$0xff]
          %v1649 = vld [vmem:[#allocation21 + $0x50] sm:$0xff]
          %v1650 = vld [vmem:[#allocation21 + $0x58] sm:$0xff]
          %v1651 = vld [vmem:[#allocation21 + $0x60] sm:$0xff]
          %v1652 = vld [vmem:[#allocation21 + $0x68] sm:$0xff]
          %v1653 = vld [vmem:[#allocation21 + $0x70] sm:$0xff]
          %v1654 = vld [vmem:[#allocation21 + $0x78] sm:$0xff]
          %v1656 = vsel %vm1400, %v1637, 0
          %v1659 = vsel %vm1400, %v1638, 0
          %1661 = vmatpush.msra.mxu0 0.0
          %1662 = vmatpush.msra.mxu0 0.0
          %1663 = vmatpush.msra.mxu0 0.0
          %1664 = vmatpush.msra.mxu0 0.0
          %1665 = vmatpush.msra.mxu0 0.0
          %1666 = vmatpush.msra.mxu0 0.0
          %1667 = vmatpush.msra.mxu0 0.0
          %1668 = vmatpush.msra.mxu0 0.0
          %1669 = vmatpush.msra.mxu0 %v1653
          %1670 = vmatpush.msra.mxu0 %v1651
          %1671 = vmatpush.msra.mxu0 %v1649
          %1672 = vmatpush.msra.mxu0 %v1647
          %1673 = vmatpush.msra.mxu0 %v1645
          %1674 = vmatpush.msra.mxu0 %v1643
          %1675 = vmatpush.msra.mxu0 %v1641
          %1676 = vmatpush.msra.mxu0 %v1639
          %1677 = vmatmul.f32.gmra.mxu0 %v1656
          %v1678 = vpop.f32.mrf.mxu0
          %v1679 = vadd.f32 0.0, %v1678
          %1680 = vmatmul.f32.gmra.mxu0 %v1659
          %v1681 = vpop.f32.mrf.mxu0
          %v1682 = vadd.f32 0.0, %v1681
          %1683 = vdwg.mxu0
          %1684 = vmatpush.msra.mxu0 0.0
          %1685 = vmatpush.msra.mxu0 0.0
          %1686 = vmatpush.msra.mxu0 0.0
          %1687 = vmatpush.msra.mxu0 0.0
          %1688 = vmatpush.msra.mxu0 0.0
          %1689 = vmatpush.msra.mxu0 0.0
          %1690 = vmatpush.msra.mxu0 0.0
          %1691 = vmatpush.msra.mxu0 0.0
          %1692 = vmatpush.msra.mxu0 %v1654
          %1693 = vmatpush.msra.mxu0 %v1652
          %1694 = vmatpush.msra.mxu0 %v1650
          %1695 = vmatpush.msra.mxu0 %v1648
          %1696 = vmatpush.msra.mxu0 %v1646
          %1697 = vmatpush.msra.mxu0 %v1644
          %1698 = vmatpush.msra.mxu0 %v1642
          %1699 = vmatpush.msra.mxu0 %v1640
          %1700 = vmatmul.f32.gmra.mxu0 %v1656
          %v1701 = vpop.f32.mrf.mxu0
          %v1702 = vadd.f32 0.0, %v1701
          %1703 = vmatmul.f32.gmra.mxu0 %v1659
          %v1704 = vpop.f32.mrf.mxu0
          %v1705 = vadd.f32 0.0, %v1704
          %1706 = vdwg.mxu0
          %v1707 = vxor.u32 %v1679, 2147483648
          %v1708 = vxor.u32 %v1682, 2147483648
          %v1709 = vmul.f32 %v1707, 1.442695
          %v1710 = vpow.pop %v1709
          %v1711 = vmul.f32 %v1708, 1.442695
          %v1712 = vpow.pop %v1711
          %v1713 = vadd.f32 %v1710, 1.0
          %v1714 = vadd.f32 %v1712, 1.0
          %v1715 = vrcp.pop %v1713
          %v1716 = vmul.f32 %v1713, %v1715
          %v1717 = vsub.f32 1.0, %v1716
          %v1718 = vmul.f32 %v1715, %v1717
          %v1719 = vadd.f32 %v1715, %v1718
          %vm1720 = vweird.f32 %v1713
          %vm1721 = vweird.f32 %v1715
          %vm1722 = vmor %vm1720, %vm1721
          %v1723 = vsel %vm1722, %v1715, %v1719
          %v1724 = vand.u32 2147483647, %v1713
          %vm1725 = vcmp.eq.f32.partialorder %v1724, 8.507059e+37
          %v1726 = vand.u32 %v1713, 2147483648
          %v1727 = vor.u32 1.1754944e-38, %v1726
          %v1728 = vsel %vm1725, %v1727, %v1723
          %v1729 = vmul.f32 1.0, %v1728
          %v1730 = vrcp.pop %v1714
          %v1731 = vmul.f32 %v1714, %v1730
          %v1732 = vsub.f32 1.0, %v1731
          %v1733 = vmul.f32 %v1730, %v1732
          %v1734 = vadd.f32 %v1730, %v1733
          %vm1735 = vweird.f32 %v1714
          %vm1736 = vweird.f32 %v1730
          %vm1737 = vmor %vm1735, %vm1736
          %v1738 = vsel %vm1737, %v1730, %v1734
          %v1739 = vand.u32 2147483647, %v1714
          %vm1740 = vcmp.eq.f32.partialorder %v1739, 8.507059e+37
          %v1741 = vand.u32 %v1714, 2147483648
          %v1742 = vor.u32 1.1754944e-38, %v1741
          %v1743 = vsel %vm1740, %v1742, %v1738
          %v1744 = vmul.f32 1.0, %v1743
          %v1745 = vmul.f32 %v1679, %v1729
          %v1746 = vmul.f32 %v1682, %v1744
          %v1747 = vmul.f32 %v1745, %v1702
          %v1748 = vmul.f32 %v1746, %v1705
          %v1749 = vld [vmem:[%s16] sm:$0xff]
          %v1750 = vld [vmem:[%s16 + $0x8] sm:$0xff]
          %v1751 = vld [vmem:[%s16 + $0x10] sm:$0xff]
          %v1752 = vld [vmem:[%s16 + $0x18] sm:$0xff]
          %v1753 = vld [vmem:[%s16 + $0x20] sm:$0xff]
          %v1754 = vld [vmem:[%s16 + $0x28] sm:$0xff]
          %v1755 = vld [vmem:[%s16 + $0x30] sm:$0xff]
          %v1756 = vld [vmem:[%s16 + $0x38] sm:$0xff]
          %v1757 = vld [vmem:[%s16 + $0x40] sm:$0xff]
          %v1758 = vld [vmem:[%s16 + $0x48] sm:$0xff]
          %v1759 = vld [vmem:[%s16 + $0x50] sm:$0xff]
          %v1760 = vld [vmem:[%s16 + $0x58] sm:$0xff]
          %v1761 = vld [vmem:[%s16 + $0x60] sm:$0xff]
          %v1762 = vld [vmem:[%s16 + $0x68] sm:$0xff]
          %v1763 = vld [vmem:[%s16 + $0x70] sm:$0xff]
          %v1764 = vld [vmem:[%s16 + $0x78] sm:$0xff]
          %1765 = vmatpush.msra.mxu0 %v1764
          %1766 = vmatpush.msra.mxu0 %v1763
          %1767 = vmatpush.msra.mxu0 %v1762
          %1768 = vmatpush.msra.mxu0 %v1761
          %1769 = vmatpush.msra.mxu0 %v1760
          %1770 = vmatpush.msra.mxu0 %v1759
          %1771 = vmatpush.msra.mxu0 %v1758
          %1772 = vmatpush.msra.mxu0 %v1757
          %1773 = vmatpush.msra.mxu0 %v1756
          %1774 = vmatpush.msra.mxu0 %v1755
          %1775 = vmatpush.msra.mxu0 %v1754
          %1776 = vmatpush.msra.mxu0 %v1753
          %1777 = vmatpush.msra.mxu0 %v1752
          %1778 = vmatpush.msra.mxu0 %v1751
          %1779 = vmatpush.msra.mxu0 %v1750
          %1780 = vmatpush.msra.mxu0 %v1749
          %1781 = vmatmul.f32.gmra.mxu0 %v1747
          %v1782 = vpop.f32.mrf.mxu0
          %v1783 = vadd.f32 0.0, %v1782
          %1784 = vmatmul.f32.gmra.mxu0 %v1748
          %v1785 = vpop.f32.mrf.mxu0
          %v1786 = vadd.f32 0.0, %v1785
          %1787 = vdwg.mxu0
          %1790 = vrot.lane.b32.xlu0 %v1783, 64
          %v1791 = vpop.permute.xlu0 %1790
          %1792 = vrot.lane.b32.xlu0 %v1786, 64
          %v1793 = vpop.permute.xlu0 %1792
          %v1796 = vmul.f32 %v1471, %v1791
          %v1797 = vmul.f32 %v1486, %v1793
          %1800 = vrot.lane.b32.xlu0 %v1796, 64
          %v1801 = vpop.permute.xlu0 %1800
          %1802 = vrot.lane.b32.xlu0 %v1797, 64
          %v1803 = vpop.permute.xlu0 %1802
          %v1806 = vadd.f32 %v1491, %v1801
          %v1807 = vadd.f32 %v1492, %v1803
          %1808 = vst.msk [vmem:[%s777] sm:$0xff] %vm1400, %v1806
          %1809 = vst.msk [vmem:[%s777 + $0x8] sm:$0xff] %vm1400, %v1807
        $region128: #{tpu_custom_call.1} parent=87 // pred_fallthru
          _
        %s1810 = sand.u32 %s444, 1
        %s1811 = scalar_lea.sflag [#allocation11], %s1810
        %s1812 = sand.u32 %s444, 1
        %s1813 = smul.addr %s1812, 16
        %s1814 = scalar_lea.vmem [#allocation23], %s1813
        // Predicated region
        $region129: #{tpu_custom_call.1} parent=87 // pred_check
          %p1815 = pneg %p454
        $region130: #{tpu_custom_call.1} parent=87 // pred_check_branch
          %1817 = sbr.rel (%p1815) target = $region132
        $region131: #{tpu_custom_call.1} parent=87 // pred_region
          %1819 = vsyncadd %s1811, 0
          %s1820 = smul.addr %s44, 2
          %s1821 = smul.addr %s1820, 8
          %s1822 = scalar_lea.hbm %s17, %s1821
          %s1823 = sshll.u32 %s1814, 4
          %s1824 = int_to_ptr.vmem [resolvable:$true] %s1823
          %s1825 = sshll.u32 %s1822, 4
          %s1826 = int_to_ptr.hbm [resolvable:$true] %s1825
          %1831 = dma.vmem_to_hbm [thread:$0]  %s1824, 256, %s1826, %s1811, 128, 128, 8
        $region132: #{tpu_custom_call.1} parent=87 // pred_fallthru
          _
      $region88: #{tpu_custom_call.1} parent=5 // pred_fallthru
        _
      %p1832 = scmp.le.s32.totalorder 2, %s35
      // Predicated region
      $region133: #{tpu_custom_call.1} parent=5 // pred_check
        %p1833 = pneg %p1832
      $region134: #{tpu_custom_call.1} parent=5 // pred_check_branch
        %1835 = sbr.rel (%p1833) target = $region136
      $region135: #{tpu_custom_call.1} parent=5 // pred_region
        %s1836 = ssub.s32 %s35, 2
        // Predicated region
        $region137: #{tpu_custom_call.1} parent=135 // pred_check
          %p1837 = pneg %p460
        $region138: #{tpu_custom_call.1} parent=135 // pred_check_branch
          %1839 = sbr.rel (%p1837) target = $region140
        $region139: #{tpu_custom_call.1} parent=135 // pred_region
          %s1840 = sand.u32 %s445, 1
          %s1841 = scalar_lea.sflag [#allocation11], %s1840
          %s1842 = sand.u32 %s445, 1
          %s1843 = smul.addr %s1842, 16
          %s1844 = scalar_lea.vmem [#allocation23], %s1843
          %1846 = dma.done %s1841, 256
        $region140: #{tpu_custom_call.1} parent=135 // pred_fallthru
          _
      $region136: #{tpu_custom_call.1} parent=5 // pred_fallthru
        _
    $region6: #{tpu_custom_call.1} parent=1 // loop_footer
      %s39 = sadd.s32 1, %s35
    $region7: #{tpu_custom_call.1} parent=1 // loop_footer_branch
      %34 = sbr.rel target = $region3
    $region8: #{tpu_custom_call.1} parent=1 // loop_exit
      _
    %1847 = vsyncpa [#allocation10], 1
    %s1848 = scalar_lea.sflag [#allocation10], 1
    %1849 = vsyncpa %s1848, 1
    %1850 = vsyncpa [#allocation13], 1
    %s1851 = scalar_lea.sflag [#allocation13], 1
    %1852 = vsyncpa %s1851, 1
    %1853 = vsyncpa [#allocation16], 1
    %1854 = vsyncpa [#allocation19], 1
    %1855 = vsyncpa [#allocation22], 1
    %1856 = vsyncpa [#allocation11], 1
    %s1857 = scalar_lea.sflag [#allocation11], 1
    %1858 = vsyncpa %s1857, 1

</llo_original>
